<compile_context>
chip_gen: v7x
topology: tpu7x:2x2x1
jax: 0.10.0
libtpu: 0.0.40
codegen_flags: <defaults>
</compile_context>

<pallas_src>
import math

import numpy as np
import jax
import jax.numpy as jnp
from jax.experimental import pallas as pl
from jax.experimental.pallas import tpu as pltpu

# ---- config (mirrors the config.json fields consumed by MambaG2G / Mamba) ----
D_MODEL = 32                       # config['d_model']
D_STATE = 16                       # config['d_state']
D_CONV = 4                         # config['d_conv']
EXPAND = 2                         # Mamba default
D_INNER = EXPAND * D_MODEL         # 64
DT_RANK = math.ceil(D_MODEL / 16)  # 2  (Mamba default dt_rank="auto")
DIM_IN = 16                        # MambaG2G dim_in  (self.D)
DIM_OUT = 8                        # MambaG2G dim_out
BATCH = 2
SEQLEN = 8

LANES = 128
LANES2 = 2 * LANES                 # 256 (blob width)
BI = BATCH * D_INNER               # 128: batch packed into lanes for the scan
BD = BATCH * D_MODEL               # 64

# ---- packed parameter blob layout (rows x 256 lanes, all offsets multiples of 8) ----
R_W_IN = 0                               # (64,256)  block-diag in_proj: [xp b0|b1 | z b0|b1]
R_W_XP = R_W_IN + BATCH * D_MODEL        # (128,256) block-diag x_proj+dt_proj fused
R_W_OUT = R_W_XP + BATCH * D_INNER       # (128,256) block-diag out_proj in cols 0:64
R_NEG_A = R_W_OUT + BATCH * D_INNER      # (16,256)  -exp(A_log)^T duplicated in cols 0:128
R_W_FC = R_NEG_A + D_STATE               # (64,256)  block-diag out_fc in cols 0:32
R_W_HEAD = R_W_FC + BATCH * D_MODEL      # (32,256)  mu/sigma heads in cols 32:64
R_MISC = R_W_HEAD + BATCH * DIM_IN       # (16,256)  small row vectors (see pack_params)
MISC_ROWS = 16
BLOB_ROWS = R_MISC + MISC_ROWS           # 448

# output-row lane layout: [xh b0|b1 (32) | mu b0|b1 (16) | sigma b0|b1 (16) | junk]
OFF_XH = 0
OFF_MU = BATCH * DIM_IN                  # 32
OFF_SG = OFF_MU + BATCH * DIM_OUT        # 48


# ---------- elementwise helpers (kernel-side) ----------
def _sigmoid(x):
    return 1.0 / (1.0 + jnp.exp(-x))


def _silu(x):
    return x * _sigmoid(x)


def _softplus(x):
    # PyTorch F.softplus switches to identity above threshold (20) -> no f32 overflow.
    safe = jnp.where(x > 20.0, 0.0, x)
    return jnp.where(x > 20.0, x, jnp.log(1.0 + jnp.exp(safe)))


def _elu(x):
    return jnp.where(x > 0, x, jnp.exp(jnp.minimum(x, 0.0)) - 1.0)


# ---------------------------------- the kernel ----------------------------------
def mamba_g2g_kernel(x_ref, w_ref, out_ref):
    x = x_ref[...]                                              # (L, B*d_model) = (8, 64)

    # ---- static slices of the packed weight blob (single resident VMEM block) ----
    w_in = w_ref[R_W_IN:R_W_IN + BATCH * D_MODEL, :]            # (64, 256)
    w_xp = w_ref[R_W_XP:R_W_XP + BATCH * D_INNER, :]            # (128, 256)
    w_out = w_ref[R_W_OUT:R_W_OUT + BATCH * D_INNER, :][:, 0:BD]        # (128, 64)
    neg_a2 = w_ref[R_NEG_A:R_NEG_A + D_STATE, :][:, 0:BI]       # (16, 128)
    w_fc = w_ref[R_W_FC:R_W_FC + BATCH * D_MODEL, :][:, 0:LANES]        # (64, 128)
    w_head = w_ref[R_W_HEAD:R_W_HEAD + BATCH * DIM_IN, :][:, 0:LANES]   # (32, 128)
    misc = w_ref[R_MISC:R_MISC + MISC_ROWS, :]                  # (16, 256)

    conv_w = misc[0:D_CONV, 0:BI]       # (4,128) taps (reversed order), dup per batch half
    conv_b = misc[4:5, 0:BI]            # (1,128)
    b_xp = misc[5:6, :]                 # (1,256)  dt_proj bias in cols 0:128
    d_row = misc[6:7, 0:BI]             # (1,128)  D, dup halves
    b_fc = misc[7:8, 0:LANES]           # (1,128)  out_fc bias in cols 0:32
    b_head = misc[8:9, 0:LANES]         # (1,128)  mu/sigma biases in cols 32:64

    # ---- Mamba in_proj (bias=False): ONE single-pass matmul for both batch elements ----
    xz = jnp.dot(x, w_in, preferred_element_type=jnp.float32)   # (8, 256)
    xp = xz[:, 0:BI]                                            # (8,128) [b0 ch | b1 ch]
    z = xz[:, BI:2 * BI]                                        # (8,128) lane-aligned slice

    # ---- causal depthwise conv1d + SiLU: XLU rolls + iota masks (no pad-concat) ----
    row_idx = jax.lax.broadcasted_iota(jnp.int32, (SEQLEN, BI), 0)
    acc = xp * conv_w[0:1, :]
    for k in range(1, D_CONV):                                  # static unroll
        shifted = pltpu.roll(xp, shift=k, axis=0)               # row t <- xp[t-k] (wraps)
        acc = acc + jnp.where(row_idx >= k, shifted, 0.0) * conv_w[k:k + 1, :]
    u = _silu(acc + conv_b)                                     # (8,128)

    # ---- fused x_proj + dt_proj (w_delta pre-fused host-side): ONE matmul, both batches ----
    xdbl = jnp.dot(u, w_xp, preferred_element_type=jnp.float32) + b_xp   # (8, 256)
    delta = _softplus(xdbl[:, 0:BI])                                     # (8,128)
    o = 2 * D_INNER
    bm0 = xdbl[:, o:o + D_STATE]                   # (8,16) B, batch 0
    bm1 = xdbl[:, o + D_STATE:o + 2 * D_STATE]     # (8,16) B, batch 1
    cm0 = xdbl[:, o + 2 * D_STATE:o + 3 * D_STATE]
    cm1 = xdbl[:, o + 3 * D_STATE:o + 4 * D_STATE]

    # ---- selective scan, batch packed in lanes (S, B*I) = (16, 128) ----
    du = delta * u                                              # (8,128)
    bshape = (SEQLEN, D_STATE, D_INNER)
    b_bc = jnp.concatenate([jnp.broadcast_to(bm0[:, :, None], bshape),
                            jnp.broadcast_to(bm1[:, :, None], bshape)], axis=2)  # (8,16,128)
    c_bc = jnp.concatenate([jnp.broadcast_to(cm0[:, :, None], bshape),
                            jnp.broadcast_to(cm1[:, :, None], bshape)], axis=2)  # (8,16,128)
    bu_all = b_bc * du[:, None, :]                              # (8,16,128)

    h = jnp.zeros((D_STATE, BI), jnp.float32)
    ys = []
    for t in range(SEQLEN):                                     # static unroll (8 steps)
        d_a = jnp.exp(delta[t:t + 1, :] * neg_a2)               # (16,128) EUP, h-independent
        h = d_a * h + bu_all[t]                                 # serial dep = one VPU FMA
        ys.append(jnp.sum(c_bc[t] * h, axis=0, keepdims=True))  # (1,128) XLU sublane reduce
    y = jnp.concatenate(ys, axis=0) + u * d_row                 # (8,128)

    # ---- gate with SiLU(z), out_proj (bias=False), both batches via block-diag weights ----
    y = y * _silu(z)
    e_seq = jnp.dot(y, w_out, preferred_element_type=jnp.float32)   # (8,64) [b0 e | b1 e]
    e = jnp.mean(e_seq, axis=0, keepdims=True)                       # (1,64)

    # ---- MambaG2G head: out_fc / tanh / ELU, mu / sigma, packed into one lane-dense row ----
    # TODO(synk): nn.Dropout is identity here (eval mode); training-mode RNG dropout not implemented.
    xh = _elu(jnp.tanh(
        jnp.dot(e, w_fc, preferred_element_type=jnp.float32) + b_fc))   # (1,128), cols 0:32 valid
    head = jnp.dot(xh[:, 0:OFF_MU], w_head,
                   preferred_element_type=jnp.float32) + b_head          # (1,128), cols 32:64 valid

    col = jax.lax.broadcasted_iota(jnp.int32, (1, LANES), 1)
    out_row = jnp.where(col < OFF_MU, xh,
                        jnp.where(col < OFF_SG, head, _elu(head) + 1.0 + 1e-14))
    out_ref[...] = jnp.broadcast_to(out_row, (8, LANES))        # one unmasked (8,128) store


# ---------------------------------- wrapper ----------------------------------
def mamba_g2g_forward(x, blob):
    """x: (B, L, d_model) float32.  blob: packed (BLOB_ROWS, 256) parameter block."""
    B, L, dm = x.shape
    assert (B, L, dm) == (BATCH, SEQLEN, D_MODEL)
    assert blob.shape == (BLOB_ROWS, LANES2)

    # fold the batch into lanes: (B,L,D) -> (L, B*D); lanes [b0 d_model | b1 d_model]
    x_p = jnp.transpose(x, (1, 0, 2)).reshape(L, B * dm)

    out = pl.pallas_call(
        mamba_g2g_kernel,
        out_shape=jax.ShapeDtypeStruct((8, LANES), jnp.float32),
        grid_spec=pltpu.PrefetchScalarGridSpec(
            num_scalar_prefetch=0,
            grid=(1,),                                           # single step: no pipeline overhead
            in_specs=[
                pl.BlockSpec((L, B * dm), lambda i: (0, 0)),
                pl.BlockSpec((BLOB_ROWS, LANES2), lambda i: (0, 0)),
            ],
            out_specs=pl.BlockSpec((8, LANES), lambda i: (0, 0)),
        ),
        compiler_params=pltpu.CompilerParams(dimension_semantics=("arbitrary",)),
    )(x_p, blob)

    row = out[0]
    xh = jnp.stack([row[OFF_XH:OFF_XH + DIM_IN], row[OFF_XH + DIM_IN:OFF_MU]])
    mu = jnp.stack([row[OFF_MU:OFF_MU + DIM_OUT], row[OFF_MU + DIM_OUT:OFF_SG]])
    sigma = jnp.stack([row[OFF_SG:OFF_SG + DIM_OUT],
                       row[OFF_SG + DIM_OUT:OFF_SG + 2 * DIM_OUT]])
    return xh, mu, sigma


# ---------------------------- parameter construction ----------------------------
def init_params(key):
    """Deterministic synthetic parameters matching the PyTorch module's shapes
    (already transposed into (in, out) layout)."""
    ks = jax.random.split(key, 16)

    def init(k, shape, scale=0.1):
        return (jax.random.normal(k, shape, jnp.float32) * scale).astype(jnp.float32)

    w_in_x = init(ks[0], (D_MODEL, D_INNER))     # in_proj, x half
    w_in_z = init(ks[1], (D_MODEL, D_INNER))     # in_proj, z half
    conv_w = init(ks[2], (D_CONV, D_INNER))      # depthwise conv taps (PyTorch orientation)
    conv_b = init(ks[3], (1, D_INNER))
    w_dtr = init(ks[4], (D_INNER, DT_RANK))      # x_proj -> dt
    w_B = init(ks[5], (D_INNER, D_STATE))        # x_proj -> B
    w_C = init(ks[6], (D_INNER, D_STATE))        # x_proj -> C
    w_dt = init(ks[7], (DT_RANK, D_INNER))       # dt_proj weight
    b_dt = init(ks[8], (1, D_INNER))             # dt_proj bias
    # Mamba-style S4D-real init: A = arange(1, d_state+1) repeated over channels.
    a_logT = jnp.tile(
        jnp.log(jnp.arange(1, D_STATE + 1, dtype=jnp.float32))[:, None], (1, D_INNER)
    )                                            # (d_state, d_inner)  == A_log^T
    d_row = jnp.ones((1, D_INNER), jnp.float32)  # D
    w_outp = init(ks[9], (D_INNER, D_MODEL))     # out_proj
    w_fc = init(ks[10], (D_MODEL, DIM_IN))       # out_fc
    b_fc = init(ks[11], (1, DIM_IN))
    w_mu = init(ks[12], (DIM_IN, DIM_OUT))       # mu_fc
    b_mu = init(ks[13], (1, DIM_OUT))
    w_sig = init(ks[14], (DIM_IN, DIM_OUT))      # sigma_fc
    b_sig = init(ks[15], (1, DIM_OUT))

    return [
        w_in_x, w_in_z, conv_w, conv_b, w_dtr, w_B, w_C, w_dt, b_dt,
        a_logT, d_row, w_outp, w_fc, b_fc, w_mu, b_mu, w_sig, b_sig,
    ]


def pack_params(p):
    """Pack / pre-fuse all weights (in float64) into one (BLOB_ROWS, 256) f32 blob with
    block-diagonal per-batch layouts so each kernel stage is a single matmul."""
    p64 = [np.asarray(a, np.float64) for a in p]
    (w_in_x, w_in_z, conv_w, conv_b, w_dtr, w_B, w_C, w_dt, b_dt,
     a_logT, d_row, w_outp, w_fc, b_fc, w_mu, b_mu, w_sig, b_sig) = p64

    blob = np.zeros((BLOB_ROWS, LANES2), np.float64)

    # in_proj block-diag: rows 0:32 = batch-0 inputs, rows 32:64 = batch-1 inputs
    blob[R_W_IN:R_W_IN + 32, 0:64] = w_in_x
    blob[R_W_IN + 32:R_W_IN + 64, 64:128] = w_in_x
    blob[R_W_IN:R_W_IN + 32, 128:192] = w_in_z
    blob[R_W_IN + 32:R_W_IN + 64, 192:256] = w_in_z

    # x_proj + dt_proj fused (w_delta = w_dtr @ w_dt), block-diag over the batch
    w_delta = w_dtr @ w_dt                                   # (64,64)
    blob[R_W_XP:R_W_XP + 64, 0:64] = w_delta
    blob[R_W_XP + 64:R_W_XP + 128, 64:128] = w_delta
    blob[R_W_XP:R_W_XP + 64, 128:144] = w_B
    blob[R_W_XP + 64:R_W_XP + 128, 144:160] = w_B
    blob[R_W_XP:R_W_XP + 64, 160:176] = w_C
    blob[R_W_XP + 64:R_W_XP + 128, 176:192] = w_C

    # out_proj block-diag
    blob[R_W_OUT:R_W_OUT + 64, 0:32] = w_outp
    blob[R_W_OUT + 64:R_W_OUT + 128, 32:64] = w_outp

    # -exp(A_log)^T duplicated for both lane halves
    neg_a = -np.exp(a_logT)                                  # (16,64)
    blob[R_NEG_A:R_NEG_A + 16, 0:64] = neg_a
    blob[R_NEG_A:R_NEG_A + 16, 64:128] = neg_a

    # out_fc block-diag
    blob[R_W_FC:R_W_FC + 32, 0:16] = w_fc
    blob[R_W_FC + 32:R_W_FC + 64, 16:32] = w_fc

    # mu / sigma heads, placed directly at their final output lanes
    blob[R_W_HEAD:R_W_HEAD + 16, 32:40] = w_mu
    blob[R_W_HEAD + 16:R_W_HEAD + 32, 40:48] = w_mu
    blob[R_W_HEAD:R_W_HEAD + 16, 48:56] = w_sig
    blob[R_W_HEAD + 16:R_W_HEAD + 32, 56:64] = w_sig

    m = R_MISC
    conv_rev = conv_w[::-1, :]               # kernel tap k multiplies x[t-k]
    blob[m + 0:m + 4, 0:64] = conv_rev
    blob[m + 0:m + 4, 64:128] = conv_rev
    blob[m + 4, 0:64] = conv_b[0]
    blob[m + 4, 64:128] = conv_b[0]
    blob[m + 5, 0:64] = b_dt[0]
    blob[m + 5, 64:128] = b_dt[0]
    blob[m + 6, 0:64] = d_row[0]
    blob[m + 6, 64:128] = d_row[0]
    blob[m + 7, 0:16] = b_fc[0]
    blob[m + 7, 16:32] = b_fc[0]
    blob[m + 8, 32:40] = b_mu[0]
    blob[m + 8, 40:48] = b_mu[0]
    blob[m + 8, 48:56] = b_sig[0]
    blob[m + 8, 56:64] = b_sig[0]

    return jnp.asarray(blob, jnp.float32)


# ---------------------------- pure-numpy (float64) reference ----------------------------
def reference_forward(x, p):
    p64 = [np.asarray(a, np.float64) for a in p]
    (w_in_x, w_in_z, conv_w, conv_b, w_dtr, w_B, w_C, w_dt, b_dt,
     a_logT, d_row, w_outp, w_fc, b_fc, w_mu, b_mu, w_sig, b_sig) = p64
    x = np.asarray(x, np.float64)
    B, L, _ = x.shape

    def sigmoid(v): return 1.0 / (1.0 + np.exp(-v))
    def silu(v): return v * sigmoid(v)
    def softplus(v): return np.where(v > 20.0, v, np.log1p(np.exp(np.minimum(v, 20.0))))
    def elu(v): return np.where(v > 0, v, np.exp(np.minimum(v, 0.0)) - 1.0)

    xp = x @ w_in_x
    z = x @ w_in_z
    xp_pad = np.pad(xp, ((0, 0), (D_CONV - 1, 0), (0, 0)))
    acc = np.zeros_like(xp)
    for k in range(D_CONV):
        acc = acc + xp_pad[:, k:k + L, :] * conv_w[k]
    u = silu(acc + conv_b)

    delta = softplus(u @ w_dtr @ w_dt + b_dt)
    Bm = u @ w_B
    Cm = u @ w_C
    A = -np.exp(a_logT)                                      # (S, I)

    h = np.zeros((B, D_STATE, D_INNER), np.float64)
    ys = []
    for t in range(L):
        dA = np.exp(delta[:, t, None, :] * A[None, :, :])
        bu = Bm[:, t, :, None] * (delta[:, t, None, :] * u[:, t, None, :])
        h = dA * h + bu
        ys.append(np.einsum('bs,bsi->bi', Cm[:, t], h))
    y = np.stack(ys, axis=1) + u * d_row
    y = y * silu(z)

    e = (y @ w_outp).mean(axis=1)                            # (B, d_model)
    xh = elu(np.tanh(e @ w_fc + b_fc))
    mu = xh @ w_mu + b_mu
    sg = elu(xh @ w_sig + b_sig) + 1.0 + 1e-14
    return xh, mu, sg


if __name__ == "__main__":
    root = jax.random.PRNGKey(0)
    k_x, k_p = jax.random.split(root)

    x = jax.random.normal(k_x, (BATCH, SEQLEN, D_MODEL), jnp.float32)
    params = init_params(k_p)
    blob = pack_params(params)

    xh, mu, sigma = mamba_g2g_forward(x, blob)
    jax.block_until_ready((xh, mu, sigma))

    assert xh.shape == (BATCH, DIM_IN)
    assert mu.shape == (BATCH, DIM_OUT)
    assert sigma.shape == (BATCH, DIM_OUT)

    # correctness check against a float64 numpy reference of the PyTorch forward.
    # tolerances account for single-pass (DEFAULT-precision) MXU matmuls in the kernel.
    xh_r, mu_r, sg_r = reference_forward(np.asarray(x), params)
    np.testing.assert_allclose(np.asarray(xh), xh_r, rtol=2e-2, atol=2e-3)
    np.testing.assert_allclose(np.asarray(mu), mu_r, rtol=2e-2, atol=2e-3)
    np.testing.assert_allclose(np.asarray(sigma), sg_r, rtol=2e-2, atol=2e-3)

    print("KERNEL_OK")
</pallas_src>

<mosaic_0001>
module attributes {stable_mosaic.version = 11 : i64} {
  func.func @mamba_g2g_kernel(%arg0: i32, %arg1: memref<8x64xf32, #tpu.memory_space<vmem>>, %arg2: memref<448x256xf32, #tpu.memory_space<vmem>>, %arg3: memref<8x128xf32, #tpu.memory_space<vmem>>) attributes {dimension_semantics = [#tpu.dimension_semantics<arbitrary>], iteration_bounds = array<i64: 1>, scalar_prefetch = 0 : i64, scratch_operands = 0 : i64, tpu.core_type = #tpu.core_type<tc>, window_params = [{pipeline_mode = #tpu.pipeline_mode<synchronous>, transform_indices = @transform_0, window_bounds = array<i64: 8, 64>}, {pipeline_mode = #tpu.pipeline_mode<synchronous>, transform_indices = @transform_1, window_bounds = array<i64: 448, 256>}, {pipeline_mode = #tpu.pipeline_mode<synchronous>, transform_indices = @transform_2, window_bounds = array<i64: 8, 128>}]} {
    %c0 = arith.constant 0 : index
    %c0_0 = arith.constant 0 : index
    %0 = vector.load %arg1[%c0, %c0_0] : memref<8x64xf32, #tpu.memory_space<vmem>>, vector<8x64xf32>
    %c0_1 = arith.constant 0 : index
    %c0_2 = arith.constant 0 : index
    %1 = vector.load %arg2[%c0_1, %c0_2] : memref<448x256xf32, #tpu.memory_space<vmem>>, vector<64x256xf32>
    %c64 = arith.constant 64 : index
    %c0_3 = arith.constant 0 : index
    %2 = vector.load %arg2[%c64, %c0_3] : memref<448x256xf32, #tpu.memory_space<vmem>>, vector<128x256xf32>
    %c192 = arith.constant 192 : index
    %c0_4 = arith.constant 0 : index
    %3 = vector.load %arg2[%c192, %c0_4] : memref<448x256xf32, #tpu.memory_space<vmem>>, vector<128x256xf32>
    %4 = vector.extract_strided_slice %3 {offsets = [0, 0], sizes = [128, 64], strides = [1, 1]} : vector<128x256xf32> to vector<128x64xf32>
    %c320 = arith.constant 320 : index
    %c0_5 = arith.constant 0 : index
    %5 = vector.load %arg2[%c320, %c0_5] : memref<448x256xf32, #tpu.memory_space<vmem>>, vector<16x256xf32>
    %6 = vector.extract_strided_slice %5 {offsets = [0, 0], sizes = [16, 128], strides = [1, 1]} : vector<16x256xf32> to vector<16x128xf32>
    %c336 = arith.constant 336 : index
    %c0_6 = arith.constant 0 : index
    %7 = vector.load %arg2[%c336, %c0_6] : memref<448x256xf32, #tpu.memory_space<vmem>>, vector<64x256xf32>
    %8 = vector.extract_strided_slice %7 {offsets = [0, 0], sizes = [64, 128], strides = [1, 1]} : vector<64x256xf32> to vector<64x128xf32>
    %c400 = arith.constant 400 : index
    %c0_7 = arith.constant 0 : index
    %9 = vector.load %arg2[%c400, %c0_7] : memref<448x256xf32, #tpu.memory_space<vmem>>, vector<32x256xf32>
    %10 = vector.extract_strided_slice %9 {offsets = [0, 0], sizes = [32, 128], strides = [1, 1]} : vector<32x256xf32> to vector<32x128xf32>
    %c432 = arith.constant 432 : index
    %c0_8 = arith.constant 0 : index
    %11 = vector.load %arg2[%c432, %c0_8] : memref<448x256xf32, #tpu.memory_space<vmem>>, vector<16x256xf32>
    %12 = vector.extract_strided_slice %11 {offsets = [0, 0], sizes = [4, 128], strides = [1, 1]} : vector<16x256xf32> to vector<4x128xf32>
    %13 = vector.extract_strided_slice %11 {offsets = [4, 0], sizes = [1, 128], strides = [1, 1]} : vector<16x256xf32> to vector<1x128xf32>
    %14 = vector.extract_strided_slice %11 {offsets = [5, 0], sizes = [1, 256], strides = [1, 1]} : vector<16x256xf32> to vector<1x256xf32>
    %15 = vector.extract_strided_slice %11 {offsets = [6, 0], sizes = [1, 128], strides = [1, 1]} : vector<16x256xf32> to vector<1x128xf32>
    %16 = vector.extract_strided_slice %11 {offsets = [7, 0], sizes = [1, 128], strides = [1, 1]} : vector<16x256xf32> to vector<1x128xf32>
    %17 = vector.extract_strided_slice %11 {offsets = [8, 0], sizes = [1, 128], strides = [1, 1]} : vector<16x256xf32> to vector<1x128xf32>
    %cst = arith.constant dense<0.000000e+00> : vector<8x256xf32>
    %18 = tpu.matmul %0, %1, %cst {dimension_numbers = #tpu.dot_dimension_numbers<[1], [0], [0], [1], [0, 0, 1, 1], [], []>} : vector<8x64xf32>, vector<64x256xf32>, vector<8x256xf32> -> vector<8x256xf32>
    %19 = vector.extract_strided_slice %18 {offsets = [0, 0], sizes = [8, 128], strides = [1, 1]} : vector<8x256xf32> to vector<8x128xf32>
    %20 = vector.extract_strided_slice %18 {offsets = [0, 128], sizes = [8, 128], strides = [1, 1]} : vector<8x256xf32> to vector<8x128xf32>
    %21 = tpu.iota {dimensions = array<i32: 0>} : vector<8x128xi32>
    %22 = vector.extract_strided_slice %12 {offsets = [0, 0], sizes = [1, 128], strides = [1, 1]} : vector<4x128xf32> to vector<1x128xf32>
    %23 = vector.broadcast %22 : vector<1x128xf32> to vector<8x128xf32>
    %24 = arith.mulf %19, %23 : vector<8x128xf32>
    %c1_i32 = arith.constant 1 : i32
    %25 = tpu.dynamic_rotate %19 by %c1_i32 dim 0 : vector<8x128xf32>, i32 -> vector<8x128xf32>
    %c1_i32_9 = arith.constant 1 : i32
    %26 = vector.broadcast %c1_i32_9 : i32 to vector<8x128xi32>
    %27 = arith.cmpi sge, %21, %26 : vector<8x128xi32>
    %cst_10 = arith.constant 0.000000e+00 : f32
    %28 = vector.broadcast %cst_10 : f32 to vector<8x128xf32>
    %29 = arith.select %27, %25, %28 : vector<8x128xi1>, vector<8x128xf32>
    %30 = vector.extract_strided_slice %12 {offsets = [1, 0], sizes = [1, 128], strides = [1, 1]} : vector<4x128xf32> to vector<1x128xf32>
    %31 = vector.broadcast %30 : vector<1x128xf32> to vector<8x128xf32>
    %32 = arith.mulf %29, %31 : vector<8x128xf32>
    %33 = arith.addf %24, %32 : vector<8x128xf32>
    %c2_i32 = arith.constant 2 : i32
    %34 = tpu.dynamic_rotate %19 by %c2_i32 dim 0 : vector<8x128xf32>, i32 -> vector<8x128xf32>
    %c2_i32_11 = arith.constant 2 : i32
    %35 = vector.broadcast %c2_i32_11 : i32 to vector<8x128xi32>
    %36 = arith.cmpi sge, %21, %35 : vector<8x128xi32>
    %cst_12 = arith.constant 0.000000e+00 : f32
    %37 = vector.broadcast %cst_12 : f32 to vector<8x128xf32>
    %38 = arith.select %36, %34, %37 : vector<8x128xi1>, vector<8x128xf32>
    %39 = vector.extract_strided_slice %12 {offsets = [2, 0], sizes = [1, 128], strides = [1, 1]} : vector<4x128xf32> to vector<1x128xf32>
    %40 = vector.broadcast %39 : vector<1x128xf32> to vector<8x128xf32>
    %41 = arith.mulf %38, %40 : vector<8x128xf32>
    %42 = arith.addf %33, %41 : vector<8x128xf32>
    %c3_i32 = arith.constant 3 : i32
    %43 = tpu.dynamic_rotate %19 by %c3_i32 dim 0 : vector<8x128xf32>, i32 -> vector<8x128xf32>
    %c3_i32_13 = arith.constant 3 : i32
    %44 = vector.broadcast %c3_i32_13 : i32 to vector<8x128xi32>
    %45 = arith.cmpi sge, %21, %44 : vector<8x128xi32>
    %cst_14 = arith.constant 0.000000e+00 : f32
    %46 = vector.broadcast %cst_14 : f32 to vector<8x128xf32>
    %47 = arith.select %45, %43, %46 : vector<8x128xi1>, vector<8x128xf32>
    %48 = vector.extract_strided_slice %12 {offsets = [3, 0], sizes = [1, 128], strides = [1, 1]} : vector<4x128xf32> to vector<1x128xf32>
    %49 = vector.broadcast %48 : vector<1x128xf32> to vector<8x128xf32>
    %50 = arith.mulf %47, %49 : vector<8x128xf32>
    %51 = arith.addf %42, %50 : vector<8x128xf32>
    %52 = vector.broadcast %13 : vector<1x128xf32> to vector<8x128xf32>
    %53 = arith.addf %51, %52 : vector<8x128xf32>
    %cst_15 = arith.constant 0.000000e+00 : f32
    %54 = vector.broadcast %cst_15 : f32 to vector<8x128xf32>
    %55 = arith.subf %54, %53 : vector<8x128xf32>
    %56 = math.exp %55 : vector<8x128xf32>
    %cst_16 = arith.constant 1.000000e+00 : f32
    %57 = vector.broadcast %cst_16 : f32 to vector<8x128xf32>
    %58 = arith.addf %57, %56 : vector<8x128xf32>
    %cst_17 = arith.constant 1.000000e+00 : f32
    %59 = vector.broadcast %cst_17 : f32 to vector<8x128xf32>
    %60 = arith.divf %59, %58 : vector<8x128xf32>
    %61 = arith.mulf %53, %60 : vector<8x128xf32>
    %cst_18 = arith.constant dense<0.000000e+00> : vector<8x256xf32>
    %62 = tpu.matmul %61, %2, %cst_18 {dimension_numbers = #tpu.dot_dimension_numbers<[1], [0], [0], [1], [0, 0, 1, 1], [], []>} : vector<8x128xf32>, vector<128x256xf32>, vector<8x256xf32> -> vector<8x256xf32>
    %63 = vector.broadcast %14 : vector<1x256xf32> to vector<8x256xf32>
    %64 = arith.addf %62, %63 : vector<8x256xf32>
    %65 = vector.extract_strided_slice %64 {offsets = [0, 0], sizes = [8, 128], strides = [1, 1]} : vector<8x256xf32> to vector<8x128xf32>
    %cst_19 = arith.constant 2.000000e+01 : f32
    %66 = vector.broadcast %cst_19 : f32 to vector<8x128xf32>
    %67 = arith.cmpf ogt, %65, %66 : vector<8x128xf32>
    %cst_20 = arith.constant 0.000000e+00 : f32
    %68 = vector.broadcast %cst_20 : f32 to vector<8x128xf32>
    %69 = arith.select %67, %68, %65 : vector<8x128xi1>, vector<8x128xf32>
    %cst_21 = arith.constant 2.000000e+01 : f32
    %70 = vector.broadcast %cst_21 : f32 to vector<8x128xf32>
    %71 = arith.cmpf ogt, %65, %70 : vector<8x128xf32>
    %72 = math.exp %69 : vector<8x128xf32>
    %cst_22 = arith.constant 1.000000e+00 : f32
    %73 = vector.broadcast %cst_22 : f32 to vector<8x128xf32>
    %74 = arith.addf %73, %72 : vector<8x128xf32>
    %75 = math.log %74 : vector<8x128xf32>
    %76 = arith.select %71, %65, %75 : vector<8x128xi1>, vector<8x128xf32>
    %77 = vector.extract_strided_slice %64 {offsets = [0, 128], sizes = [8, 16], strides = [1, 1]} : vector<8x256xf32> to vector<8x16xf32>
    %78 = vector.extract_strided_slice %64 {offsets = [0, 144], sizes = [8, 16], strides = [1, 1]} : vector<8x256xf32> to vector<8x16xf32>
    %79 = vector.extract_strided_slice %64 {offsets = [0, 160], sizes = [8, 16], strides = [1, 1]} : vector<8x256xf32> to vector<8x16xf32>
    %80 = vector.extract_strided_slice %64 {offsets = [0, 176], sizes = [8, 16], strides = [1, 1]} : vector<8x256xf32> to vector<8x16xf32>
    %81 = arith.mulf %76, %61 : vector<8x128xf32>
    %82 = vector.shape_cast %77 : vector<8x16xf32> to vector<8x16x1xf32>
    %83 = vector.shape_cast %82 : vector<8x16x1xf32> to vector<8x16x1xf32>
    %84 = vector.broadcast %83 : vector<8x16x1xf32> to vector<8x16x64xf32>
    %85 = vector.shape_cast %78 : vector<8x16xf32> to vector<8x16x1xf32>
    %86 = vector.shape_cast %85 : vector<8x16x1xf32> to vector<8x16x1xf32>
    %87 = vector.broadcast %86 : vector<8x16x1xf32> to vector<8x16x64xf32>
    %88 = tpu.concatenate %84, %87 in 2 : vector<8x16x64xf32>, vector<8x16x64xf32> -> vector<8x16x128xf32>
    %89 = vector.shape_cast %79 : vector<8x16xf32> to vector<8x16x1xf32>
    %90 = vector.shape_cast %89 : vector<8x16x1xf32> to vector<8x16x1xf32>
    %91 = vector.broadcast %90 : vector<8x16x1xf32> to vector<8x16x64xf32>
    %92 = vector.shape_cast %80 : vector<8x16xf32> to vector<8x16x1xf32>
    %93 = vector.shape_cast %92 : vector<8x16x1xf32> to vector<8x16x1xf32>
    %94 = vector.broadcast %93 : vector<8x16x1xf32> to vector<8x16x64xf32>
    %95 = tpu.concatenate %91, %94 in 2 : vector<8x16x64xf32>, vector<8x16x64xf32> -> vector<8x16x128xf32>
    %96 = vector.shape_cast %81 : vector<8x128xf32> to vector<8x1x128xf32>
    %97 = vector.broadcast %96 : vector<8x1x128xf32> to vector<8x16x128xf32>
    %98 = arith.mulf %88, %97 : vector<8x16x128xf32>
    %cst_23 = arith.constant 0.000000e+00 : f32
    %99 = vector.broadcast %cst_23 : f32 to vector<16x128xf32>
    %100 = vector.extract_strided_slice %76 {offsets = [0, 0], sizes = [1, 128], strides = [1, 1]} : vector<8x128xf32> to vector<1x128xf32>
    %101 = vector.broadcast %100 : vector<1x128xf32> to vector<16x128xf32>
    %102 = arith.mulf %101, %6 : vector<16x128xf32>
    %103 = math.exp %102 : vector<16x128xf32>
    %104 = arith.mulf %103, %99 : vector<16x128xf32>
    %105 = vector.extract_strided_slice %98 {offsets = [0, 0, 0], sizes = [1, 16, 128], strides = [1, 1, 1]} : vector<8x16x128xf32> to vector<1x16x128xf32>
    %106 = vector.shape_cast %105 : vector<1x16x128xf32> to vector<16x128xf32>
    %107 = arith.addf %104, %106 : vector<16x128xf32>
    %108 = vector.extract_strided_slice %95 {offsets = [0, 0, 0], sizes = [1, 16, 128], strides = [1, 1, 1]} : vector<8x16x128xf32> to vector<1x16x128xf32>
    %109 = vector.shape_cast %108 : vector<1x16x128xf32> to vector<16x128xf32>
    %110 = arith.mulf %109, %107 : vector<16x128xf32>
    %cst_24 = arith.constant dense<0.000000e+00> : vector<128xf32>
    %111 = vector.multi_reduction <add>, %110, %cst_24 [0] : vector<16x128xf32> to vector<128xf32>
    %112 = vector.shape_cast %111 : vector<128xf32> to vector<1x128xf32>
    %113 = vector.extract_strided_slice %76 {offsets = [1, 0], sizes = [1, 128], strides = [1, 1]} : vector<8x128xf32> to vector<1x128xf32>
    %114 = vector.broadcast %113 : vector<1x128xf32> to vector<16x128xf32>
    %115 = arith.mulf %114, %6 : vector<16x128xf32>
    %116 = math.exp %115 : vector<16x128xf32>
    %117 = arith.mulf %116, %107 : vector<16x128xf32>
    %118 = vector.extract_strided_slice %98 {offsets = [1, 0, 0], sizes = [1, 16, 128], strides = [1, 1, 1]} : vector<8x16x128xf32> to vector<1x16x128xf32>
    %119 = vector.shape_cast %118 : vector<1x16x128xf32> to vector<16x128xf32>
    %120 = arith.addf %117, %119 : vector<16x128xf32>
    %121 = vector.extract_strided_slice %95 {offsets = [1, 0, 0], sizes = [1, 16, 128], strides = [1, 1, 1]} : vector<8x16x128xf32> to vector<1x16x128xf32>
    %122 = vector.shape_cast %121 : vector<1x16x128xf32> to vector<16x128xf32>
    %123 = arith.mulf %122, %120 : vector<16x128xf32>
    %cst_25 = arith.constant dense<0.000000e+00> : vector<128xf32>
    %124 = vector.multi_reduction <add>, %123, %cst_25 [0] : vector<16x128xf32> to vector<128xf32>
    %125 = vector.shape_cast %124 : vector<128xf32> to vector<1x128xf32>
    %126 = vector.extract_strided_slice %76 {offsets = [2, 0], sizes = [1, 128], strides = [1, 1]} : vector<8x128xf32> to vector<1x128xf32>
    %127 = vector.broadcast %126 : vector<1x128xf32> to vector<16x128xf32>
    %128 = arith.mulf %127, %6 : vector<16x128xf32>
    %129 = math.exp %128 : vector<16x128xf32>
    %130 = arith.mulf %129, %120 : vector<16x128xf32>
    %131 = vector.extract_strided_slice %98 {offsets = [2, 0, 0], sizes = [1, 16, 128], strides = [1, 1, 1]} : vector<8x16x128xf32> to vector<1x16x128xf32>
    %132 = vector.shape_cast %131 : vector<1x16x128xf32> to vector<16x128xf32>
    %133 = arith.addf %130, %132 : vector<16x128xf32>
    %134 = vector.extract_strided_slice %95 {offsets = [2, 0, 0], sizes = [1, 16, 128], strides = [1, 1, 1]} : vector<8x16x128xf32> to vector<1x16x128xf32>
    %135 = vector.shape_cast %134 : vector<1x16x128xf32> to vector<16x128xf32>
    %136 = arith.mulf %135, %133 : vector<16x128xf32>
    %cst_26 = arith.constant dense<0.000000e+00> : vector<128xf32>
    %137 = vector.multi_reduction <add>, %136, %cst_26 [0] : vector<16x128xf32> to vector<128xf32>
    %138 = vector.shape_cast %137 : vector<128xf32> to vector<1x128xf32>
    %139 = vector.extract_strided_slice %76 {offsets = [3, 0], sizes = [1, 128], strides = [1, 1]} : vector<8x128xf32> to vector<1x128xf32>
    %140 = vector.broadcast %139 : vector<1x128xf32> to vector<16x128xf32>
    %141 = arith.mulf %140, %6 : vector<16x128xf32>
    %142 = math.exp %141 : vector<16x128xf32>
    %143 = arith.mulf %142, %133 : vector<16x128xf32>
    %144 = vector.extract_strided_slice %98 {offsets = [3, 0, 0], sizes = [1, 16, 128], strides = [1, 1, 1]} : vector<8x16x128xf32> to vector<1x16x128xf32>
    %145 = vector.shape_cast %144 : vector<1x16x128xf32> to vector<16x128xf32>
    %146 = arith.addf %143, %145 : vector<16x128xf32>
    %147 = vector.extract_strided_slice %95 {offsets = [3, 0, 0], sizes = [1, 16, 128], strides = [1, 1, 1]} : vector<8x16x128xf32> to vector<1x16x128xf32>
    %148 = vector.shape_cast %147 : vector<1x16x128xf32> to vector<16x128xf32>
    %149 = arith.mulf %148, %146 : vector<16x128xf32>
    %cst_27 = arith.constant dense<0.000000e+00> : vector<128xf32>
    %150 = vector.multi_reduction <add>, %149, %cst_27 [0] : vector<16x128xf32> to vector<128xf32>
    %151 = vector.shape_cast %150 : vector<128xf32> to vector<1x128xf32>
    %152 = vector.extract_strided_slice %76 {offsets = [4, 0], sizes = [1, 128], strides = [1, 1]} : vector<8x128xf32> to vector<1x128xf32>
    %153 = vector.broadcast %152 : vector<1x128xf32> to vector<16x128xf32>
    %154 = arith.mulf %153, %6 : vector<16x128xf32>
    %155 = math.exp %154 : vector<16x128xf32>
    %156 = arith.mulf %155, %146 : vector<16x128xf32>
    %157 = vector.extract_strided_slice %98 {offsets = [4, 0, 0], sizes = [1, 16, 128], strides = [1, 1, 1]} : vector<8x16x128xf32> to vector<1x16x128xf32>
    %158 = vector.shape_cast %157 : vector<1x16x128xf32> to vector<16x128xf32>
    %159 = arith.addf %156, %158 : vector<16x128xf32>
    %160 = vector.extract_strided_slice %95 {offsets = [4, 0, 0], sizes = [1, 16, 128], strides = [1, 1, 1]} : vector<8x16x128xf32> to vector<1x16x128xf32>
    %161 = vector.shape_cast %160 : vector<1x16x128xf32> to vector<16x128xf32>
    %162 = arith.mulf %161, %159 : vector<16x128xf32>
    %cst_28 = arith.constant dense<0.000000e+00> : vector<128xf32>
    %163 = vector.multi_reduction <add>, %162, %cst_28 [0] : vector<16x128xf32> to vector<128xf32>
    %164 = vector.shape_cast %163 : vector<128xf32> to vector<1x128xf32>
    %165 = vector.extract_strided_slice %76 {offsets = [5, 0], sizes = [1, 128], strides = [1, 1]} : vector<8x128xf32> to vector<1x128xf32>
    %166 = vector.broadcast %165 : vector<1x128xf32> to vector<16x128xf32>
    %167 = arith.mulf %166, %6 : vector<16x128xf32>
    %168 = math.exp %167 : vector<16x128xf32>
    %169 = arith.mulf %168, %159 : vector<16x128xf32>
    %170 = vector.extract_strided_slice %98 {offsets = [5, 0, 0], sizes = [1, 16, 128], strides = [1, 1, 1]} : vector<8x16x128xf32> to vector<1x16x128xf32>
    %171 = vector.shape_cast %170 : vector<1x16x128xf32> to vector<16x128xf32>
    %172 = arith.addf %169, %171 : vector<16x128xf32>
    %173 = vector.extract_strided_slice %95 {offsets = [5, 0, 0], sizes = [1, 16, 128], strides = [1, 1, 1]} : vector<8x16x128xf32> to vector<1x16x128xf32>
    %174 = vector.shape_cast %173 : vector<1x16x128xf32> to vector<16x128xf32>
    %175 = arith.mulf %174, %172 : vector<16x128xf32>
    %cst_29 = arith.constant dense<0.000000e+00> : vector<128xf32>
    %176 = vector.multi_reduction <add>, %175, %cst_29 [0] : vector<16x128xf32> to vector<128xf32>
    %177 = vector.shape_cast %176 : vector<128xf32> to vector<1x128xf32>
    %178 = vector.extract_strided_slice %76 {offsets = [6, 0], sizes = [1, 128], strides = [1, 1]} : vector<8x128xf32> to vector<1x128xf32>
    %179 = vector.broadcast %178 : vector<1x128xf32> to vector<16x128xf32>
    %180 = arith.mulf %179, %6 : vector<16x128xf32>
    %181 = math.exp %180 : vector<16x128xf32>
    %182 = arith.mulf %181, %172 : vector<16x128xf32>
    %183 = vector.extract_strided_slice %98 {offsets = [6, 0, 0], sizes = [1, 16, 128], strides = [1, 1, 1]} : vector<8x16x128xf32> to vector<1x16x128xf32>
    %184 = vector.shape_cast %183 : vector<1x16x128xf32> to vector<16x128xf32>
    %185 = arith.addf %182, %184 : vector<16x128xf32>
    %186 = vector.extract_strided_slice %95 {offsets = [6, 0, 0], sizes = [1, 16, 128], strides = [1, 1, 1]} : vector<8x16x128xf32> to vector<1x16x128xf32>
    %187 = vector.shape_cast %186 : vector<1x16x128xf32> to vector<16x128xf32>
    %188 = arith.mulf %187, %185 : vector<16x128xf32>
    %cst_30 = arith.constant dense<0.000000e+00> : vector<128xf32>
    %189 = vector.multi_reduction <add>, %188, %cst_30 [0] : vector<16x128xf32> to vector<128xf32>
    %190 = vector.shape_cast %189 : vector<128xf32> to vector<1x128xf32>
    %191 = vector.extract_strided_slice %76 {offsets = [7, 0], sizes = [1, 128], strides = [1, 1]} : vector<8x128xf32> to vector<1x128xf32>
    %192 = vector.broadcast %191 : vector<1x128xf32> to vector<16x128xf32>
    %193 = arith.mulf %192, %6 : vector<16x128xf32>
    %194 = math.exp %193 : vector<16x128xf32>
    %195 = arith.mulf %194, %185 : vector<16x128xf32>
    %196 = vector.extract_strided_slice %98 {offsets = [7, 0, 0], sizes = [1, 16, 128], strides = [1, 1, 1]} : vector<8x16x128xf32> to vector<1x16x128xf32>
    %197 = vector.shape_cast %196 : vector<1x16x128xf32> to vector<16x128xf32>
    %198 = arith.addf %195, %197 : vector<16x128xf32>
    %199 = vector.extract_strided_slice %95 {offsets = [7, 0, 0], sizes = [1, 16, 128], strides = [1, 1, 1]} : vector<8x16x128xf32> to vector<1x16x128xf32>
    %200 = vector.shape_cast %199 : vector<1x16x128xf32> to vector<16x128xf32>
    %201 = arith.mulf %200, %198 : vector<16x128xf32>
    %cst_31 = arith.constant dense<0.000000e+00> : vector<128xf32>
    %202 = vector.multi_reduction <add>, %201, %cst_31 [0] : vector<16x128xf32> to vector<128xf32>
    %203 = vector.shape_cast %202 : vector<128xf32> to vector<1x128xf32>
    %204 = tpu.concatenate %112, %125, %138, %151, %164, %177, %190, %203 in 0 : vector<1x128xf32>, vector<1x128xf32>, vector<1x128xf32>, vector<1x128xf32>, vector<1x128xf32>, vector<1x128xf32>, vector<1x128xf32>, vector<1x128xf32> -> vector<8x128xf32>
    %205 = vector.broadcast %15 : vector<1x128xf32> to vector<8x128xf32>
    %206 = arith.mulf %61, %205 : vector<8x128xf32>
    %207 = arith.addf %204, %206 : vector<8x128xf32>
    %cst_32 = arith.constant 0.000000e+00 : f32
    %208 = vector.broadcast %cst_32 : f32 to vector<8x128xf32>
    %209 = arith.subf %208, %20 : vector<8x128xf32>
    %210 = math.exp %209 : vector<8x128xf32>
    %cst_33 = arith.constant 1.000000e+00 : f32
    %211 = vector.broadcast %cst_33 : f32 to vector<8x128xf32>
    %212 = arith.addf %211, %210 : vector<8x128xf32>
    %cst_34 = arith.constant 1.000000e+00 : f32
    %213 = vector.broadcast %cst_34 : f32 to vector<8x128xf32>
    %214 = arith.divf %213, %212 : vector<8x128xf32>
    %215 = arith.mulf %20, %214 : vector<8x128xf32>
    %216 = arith.mulf %207, %215 : vector<8x128xf32>
    %cst_35 = arith.constant dense<0.000000e+00> : vector<8x64xf32>
    %217 = tpu.matmul %216, %4, %cst_35 {dimension_numbers = #tpu.dot_dimension_numbers<[1], [0], [0], [1], [0, 0, 1, 1], [], []>} : vector<8x128xf32>, vector<128x64xf32>, vector<8x64xf32> -> vector<8x64xf32>
    %cst_36 = arith.constant dense<0.000000e+00> : vector<64xf32>
    %218 = vector.multi_reduction <add>, %217, %cst_36 [0] : vector<8x64xf32> to vector<64xf32>
    %219 = vector.shape_cast %218 : vector<64xf32> to vector<1x64xf32>
    %cst_37 = arith.constant 8.000000e+00 : f32
    %220 = vector.broadcast %cst_37 : f32 to vector<1x64xf32>
    %221 = arith.divf %219, %220 : vector<1x64xf32>
    %cst_38 = arith.constant dense<0.000000e+00> : vector<1x128xf32>
    %222 = tpu.matmul %221, %8, %cst_38 {dimension_numbers = #tpu.dot_dimension_numbers<[1], [0], [0], [1], [0, 0, 1, 1], [], []>} : vector<1x64xf32>, vector<64x128xf32>, vector<1x128xf32> -> vector<1x128xf32>
    %223 = arith.addf %222, %16 : vector<1x128xf32>
    %224 = math.tanh %223 : vector<1x128xf32>
    %cst_39 = arith.constant 0.000000e+00 : f32
    %225 = vector.broadcast %cst_39 : f32 to vector<1x128xf32>
    %226 = arith.cmpf ogt, %224, %225 : vector<1x128xf32>
    %cst_40 = arith.constant 0.000000e+00 : f32
    %227 = vector.broadcast %cst_40 : f32 to vector<1x128xf32>
    %228 = arith.minimumf %224, %227 : vector<1x128xf32>
    %229 = math.exp %228 : vector<1x128xf32>
    %cst_41 = arith.constant 1.000000e+00 : f32
    %230 = vector.broadcast %cst_41 : f32 to vector<1x128xf32>
    %231 = arith.subf %229, %230 : vector<1x128xf32>
    %232 = arith.select %226, %224, %231 : vector<1x128xi1>, vector<1x128xf32>
    %233 = vector.extract_strided_slice %232 {offsets = [0, 0], sizes = [1, 32], strides = [1, 1]} : vector<1x128xf32> to vector<1x32xf32>
    %cst_42 = arith.constant dense<0.000000e+00> : vector<1x128xf32>
    %234 = tpu.matmul %233, %10, %cst_42 {dimension_numbers = #tpu.dot_dimension_numbers<[1], [0], [0], [1], [0, 0, 1, 1], [], []>} : vector<1x32xf32>, vector<32x128xf32>, vector<1x128xf32> -> vector<1x128xf32>
    %235 = arith.addf %234, %17 : vector<1x128xf32>
    %236 = tpu.iota {dimensions = array<i32: 1>} : vector<1x128xi32>
    %c32_i32 = arith.constant 32 : i32
    %237 = vector.broadcast %c32_i32 : i32 to vector<1x128xi32>
    %238 = arith.cmpi slt, %236, %237 : vector<1x128xi32>
    %c48_i32 = arith.constant 48 : i32
    %239 = vector.broadcast %c48_i32 : i32 to vector<1x128xi32>
    %240 = arith.cmpi slt, %236, %239 : vector<1x128xi32>
    %cst_43 = arith.constant 0.000000e+00 : f32
    %241 = vector.broadcast %cst_43 : f32 to vector<1x128xf32>
    %242 = arith.cmpf ogt, %235, %241 : vector<1x128xf32>
    %cst_44 = arith.constant 0.000000e+00 : f32
    %243 = vector.broadcast %cst_44 : f32 to vector<1x128xf32>
    %244 = arith.minimumf %235, %243 : vector<1x128xf32>
    %245 = math.exp %244 : vector<1x128xf32>
    %cst_45 = arith.constant 1.000000e+00 : f32
    %246 = vector.broadcast %cst_45 : f32 to vector<1x128xf32>
    %247 = arith.subf %245, %246 : vector<1x128xf32>
    %248 = arith.select %242, %235, %247 : vector<1x128xi1>, vector<1x128xf32>
    %cst_46 = arith.constant 1.000000e+00 : f32
    %249 = vector.broadcast %cst_46 : f32 to vector<1x128xf32>
    %250 = arith.addf %248, %249 : vector<1x128xf32>
    %cst_47 = arith.constant 9.99999982E-15 : f32
    %251 = vector.broadcast %cst_47 : f32 to vector<1x128xf32>
    %252 = arith.addf %250, %251 : vector<1x128xf32>
    %253 = arith.select %240, %235, %252 : vector<1x128xi1>, vector<1x128xf32>
    %254 = arith.select %238, %232, %253 : vector<1x128xi1>, vector<1x128xf32>
    %255 = vector.shape_cast %254 : vector<1x128xf32> to vector<1x128xf32>
    %256 = vector.broadcast %255 : vector<1x128xf32> to vector<8x128xf32>
    %c0_48 = arith.constant 0 : index
    %c0_49 = arith.constant 0 : index
    %257 = vector.load %arg3[%c0_48, %c0_49] : memref<8x128xf32, #tpu.memory_space<vmem>>, vector<8x128xf32>
    tpu.vector_store %arg3[%c0_48, %c0_49], %256 {strides = array<i32>} : memref<8x128xf32, #tpu.memory_space<vmem>>, vector<8x128xf32>,
    return
  }
  func.func @transform_0(%arg0: i32) -> (i32, i32) {
    %c0_i32 = arith.constant 0 : i32
    %c0_i32_0 = arith.constant 0 : i32
    %c0_i32_1 = arith.constant 0 : i32
    return %c0_i32, %c0_i32_0 : i32, i32
  }
  func.func @transform_1(%arg0: i32) -> (i32, i32) {
    %c0_i32 = arith.constant 0 : i32
    %c0_i32_0 = arith.constant 0 : i32
    %c0_i32_1 = arith.constant 0 : i32
    return %c0_i32, %c0_i32_0 : i32, i32
  }
  func.func @transform_2(%arg0: i32) -> (i32, i32) {
    %c0_i32 = arith.constant 0 : i32
    %c0_i32_0 = arith.constant 0 : i32
    %c0_i32_1 = arith.constant 0 : i32
    return %c0_i32, %c0_i32_0 : i32, i32
  }
}

</mosaic_0001>

<llo_original>
// kernel: tpu_custom_call.1
$region0: #{tpu_custom_call.1}
  #allocation0 [shape = 'u32[]', space=smem, size = 0x4, offset = 0x4, fixed_abs, tag = 'smem constant byte address 0x4 - core index']
  #allocation1 [shape = 'u32[144,128]{1,0:T(1,128)}', space=vmem, size = 0x12000, scoped, tag = 'internal scratch']
  %s0 = inlined_call_operand.hbm [shape: f32[8,64], index: 0, kind: input, shape index: {}]
  %s1 = inlined_call_operand.hbm [shape: f32[448,256], index: 1, kind: input, shape index: {}]
  %s2 = inlined_call_operand.hbm [shape: f32[8,128], index: 2, kind: output, shape index: {}]
  %s3 = sld [smem:[#allocation0]]
  $region26: #{tpu_custom_call.1} parent=0
    _
  %s5 = ssub.s32 1, %s3
  %s6 = scalar_select 0, %s5, %s3
  $region1: #{tpu_custom_call.1} parent=0
    #allocation2 [shape = 'u8[4096]{0}', space=vmem, size = 0x1000, scoped, tag = 'input window, operand 0, single buffered']
    #allocation3 [shape = 's32[1]{0}', space=sflag, size = 0x4, scoped, tag = 'scoped memory for tpu_custom_call.1']
    #allocation4 [shape = 's32[1]{0}', space=sflag, size = 0x4, scoped, tag = 'scoped memory for tpu_custom_call.1']
    #allocation5 [shape = 'u8[458752]{0}', space=vmem, size = 0x70000, scoped, tag = 'input window, operand 1, single buffered']
    #allocation6 [shape = 's32[1]{0}', space=sflag, size = 0x4, scoped, tag = 'scoped memory for tpu_custom_call.1']
    #allocation7 [shape = 'u8[4096]{0}', space=vmem, size = 0x1000, scoped, tag = 'output window, operand 0, single buffered']
    %7 = vsyncpa [#allocation3], 0
    %8 = vsyncpa [#allocation6], 0
    %9 = vsyncpa [#allocation4], 0
    // Predicated region
    $region2: #{tpu_custom_call.1} parent=1 // pred_check
      _
    $region3: #{tpu_custom_call.1} parent=1 // pred_check_branch
      %11 = sbr.rel (0) target = $region5
    $region4: #{tpu_custom_call.1} parent=1 // pred_region
      %s13 = ssub.s32 128, 128
      %14 = vsyncadd [#allocation3], %s13
      %s16 = sshll.u32 [#allocation2], 4
      %s17 = int_to_ptr.vmem [resolvable:$true] %s16
      %19 = dma.hbm_to_vmem [thread:$0]  %s0, 128, %s17, [#allocation3]
    $region5: #{tpu_custom_call.1} parent=1 // pred_fallthru
      _
    // Predicated region
    $region6: #{tpu_custom_call.1} parent=1 // pred_check
      _
    $region7: #{tpu_custom_call.1} parent=1 // pred_check_branch
      %21 = sbr.rel (0) target = $region9
    $region8: #{tpu_custom_call.1} parent=1 // pred_region
      %s23 = ssub.s32 14336, 14336
      %24 = vsyncadd [#allocation6], %s23
      %s25 = sshll.u32 [#allocation5], 4
      %s26 = int_to_ptr.vmem [resolvable:$true] %s25
      %31 = dma.hbm_to_vmem [thread:$0]  %s1, 14336, %s26, [#allocation6], 256, 256, 16
    $region9: #{tpu_custom_call.1} parent=1 // pred_fallthru
      _
    // Predicated region
    $region10: #{tpu_custom_call.1} parent=1 // pred_check
      _
    $region11: #{tpu_custom_call.1} parent=1 // pred_check_branch
      %33 = sbr.rel (0) target = $region13
    $region12: #{tpu_custom_call.1} parent=1 // pred_region
      %34 = dma.done [#allocation3], 128
    $region13: #{tpu_custom_call.1} parent=1 // pred_fallthru
      _
    // Predicated region
    $region14: #{tpu_custom_call.1} parent=1 // pred_check
      _
    $region15: #{tpu_custom_call.1} parent=1 // pred_check_branch
      %36 = sbr.rel (0) target = $region17
    $region16: #{tpu_custom_call.1} parent=1 // pred_region
      %37 = dma.done [#allocation6], 14336
    $region17: #{tpu_custom_call.1} parent=1 // pred_fallthru
      _
    %v38 = vld [vmem:[#allocation2] sm:$0xff]
    %v39 = vld [vmem:[#allocation5] sm:$0xff]
    %v40 = vld [vmem:[#allocation5 + $0x8] sm:$0xff]
    %v41 = vld [vmem:[#allocation5 + $0x10] sm:$0xff]
    %v42 = vld [vmem:[#allocation5 + $0x18] sm:$0xff]
    %v43 = vld [vmem:[#allocation5 + $0x20] sm:$0xff]
    %v44 = vld [vmem:[#allocation5 + $0x28] sm:$0xff]
    %v45 = vld [vmem:[#allocation5 + $0x30] sm:$0xff]
    %v46 = vld [vmem:[#allocation5 + $0x38] sm:$0xff]
    %v47 = vld [vmem:[#allocation5 + $0x40] sm:$0xff]
    %v48 = vld [vmem:[#allocation5 + $0x48] sm:$0xff]
    %v49 = vld [vmem:[#allocation5 + $0x50] sm:$0xff]
    %v50 = vld [vmem:[#allocation5 + $0x58] sm:$0xff]
    %v51 = vld [vmem:[#allocation5 + $0x60] sm:$0xff]
    %v52 = vld [vmem:[#allocation5 + $0x68] sm:$0xff]
    %v53 = vld [vmem:[#allocation5 + $0x70] sm:$0xff]
    %v54 = vld [vmem:[#allocation5 + $0x78] sm:$0xff]
    %v55 = vld [vmem:[#allocation5 + $0x80] sm:$0xff]
    %v56 = vld [vmem:[#allocation5 + $0x88] sm:$0xff]
    %v57 = vld [vmem:[#allocation5 + $0x90] sm:$0xff]
    %v58 = vld [vmem:[#allocation5 + $0x98] sm:$0xff]
    %v59 = vld [vmem:[#allocation5 + $0xa0] sm:$0xff]
    %v60 = vld [vmem:[#allocation5 + $0xa8] sm:$0xff]
    %v61 = vld [vmem:[#allocation5 + $0xb0] sm:$0xff]
    %v62 = vld [vmem:[#allocation5 + $0xb8] sm:$0xff]
    %v63 = vld [vmem:[#allocation5 + $0xc0] sm:$0xff]
    %v64 = vld [vmem:[#allocation5 + $0xc8] sm:$0xff]
    %v65 = vld [vmem:[#allocation5 + $0xd0] sm:$0xff]
    %v66 = vld [vmem:[#allocation5 + $0xd8] sm:$0xff]
    %v67 = vld [vmem:[#allocation5 + $0xe0] sm:$0xff]
    %v68 = vld [vmem:[#allocation5 + $0xe8] sm:$0xff]
    %v69 = vld [vmem:[#allocation5 + $0xf0] sm:$0xff]
    %v70 = vld [vmem:[#allocation5 + $0xf8] sm:$0xff]
    %v71 = vld [vmem:[#allocation5 + $0x100] sm:$0xff]
    %v72 = vld [vmem:[#allocation5 + $0x108] sm:$0xff]
    %v73 = vld [vmem:[#allocation5 + $0x110] sm:$0xff]
    %v74 = vld [vmem:[#allocation5 + $0x118] sm:$0xff]
    %v75 = vld [vmem:[#allocation5 + $0x120] sm:$0xff]
    %v76 = vld [vmem:[#allocation5 + $0x128] sm:$0xff]
    %v77 = vld [vmem:[#allocation5 + $0x130] sm:$0xff]
    %v78 = vld [vmem:[#allocation5 + $0x138] sm:$0xff]
    %v79 = vld [vmem:[#allocation5 + $0x140] sm:$0xff]
    %v80 = vld [vmem:[#allocation5 + $0x148] sm:$0xff]
    %v81 = vld [vmem:[#allocation5 + $0x150] sm:$0xff]
    %v82 = vld [vmem:[#allocation5 + $0x158] sm:$0xff]
    %v83 = vld [vmem:[#allocation5 + $0x160] sm:$0xff]
    %v84 = vld [vmem:[#allocation5 + $0x168] sm:$0xff]
    %v85 = vld [vmem:[#allocation5 + $0x170] sm:$0xff]
    %v86 = vld [vmem:[#allocation5 + $0x178] sm:$0xff]
    %v87 = vld [vmem:[#allocation5 + $0x180] sm:$0xff]
    %v88 = vld [vmem:[#allocation5 + $0x190] sm:$0xff]
    %v89 = vld [vmem:[#allocation5 + $0x1a0] sm:$0xff]
    %v90 = vld [vmem:[#allocation5 + $0x1b0] sm:$0xff]
    %v91 = vld [vmem:[#allocation5 + $0x1c0] sm:$0xff]
    %v92 = vld [vmem:[#allocation5 + $0x1d0] sm:$0xff]
    %v93 = vld [vmem:[#allocation5 + $0x1e0] sm:$0xff]
    %v94 = vld [vmem:[#allocation5 + $0x1f0] sm:$0xff]
    %v95 = vld [vmem:[#allocation5 + $0x200] sm:$0xff]
    %v96 = vld [vmem:[#allocation5 + $0x210] sm:$0xff]
    %v97 = vld [vmem:[#allocation5 + $0x220] sm:$0xff]
    %v98 = vld [vmem:[#allocation5 + $0x230] sm:$0xff]
    %v99 = vld [vmem:[#allocation5 + $0x240] sm:$0xff]
    %v100 = vld [vmem:[#allocation5 + $0x250] sm:$0xff]
    %v101 = vld [vmem:[#allocation5 + $0x260] sm:$0xff]
    %v102 = vld [vmem:[#allocation5 + $0x270] sm:$0xff]
    %v103 = vld [vmem:[#allocation5 + $0x280] sm:$0xff]
    %v104 = vld [vmem:[#allocation5 + $0x290] sm:$0xff]
    %v105 = vld [vmem:[#allocation5 + $0x2a0] sm:$0xff]
    %v106 = vld [vmem:[#allocation5 + $0x2b0] sm:$0xff]
    %v107 = vld [vmem:[#allocation5 + $0x2c0] sm:$0xff]
    %v108 = vld [vmem:[#allocation5 + $0x2d0] sm:$0xff]
    %v109 = vld [vmem:[#allocation5 + $0x2e0] sm:$0xff]
    %v110 = vld [vmem:[#allocation5 + $0x2f0] sm:$0xff]
    %v111 = vld [vmem:[#allocation5 + $0x300] sm:$0xff]
    %v112 = vld [vmem:[#allocation5 + $0x310] sm:$0xff]
    %v113 = vld [vmem:[#allocation5 + $0x320] sm:$0xff]
    %v114 = vld [vmem:[#allocation5 + $0x330] sm:$0xff]
    %v115 = vld [vmem:[#allocation5 + $0x340] sm:$0xff]
    %v116 = vld [vmem:[#allocation5 + $0x350] sm:$0xff]
    %v117 = vld [vmem:[#allocation5 + $0x360] sm:$0xff]
    %v118 = vld [vmem:[#allocation5 + $0x368] sm:$0xff]
    %v119 = vld [vmem:[#allocation5 + $0x370] sm:$0xff]
    %vm120 = vcmask 523264
    %v122 = vsel %vm120, %v38, 0
    %124 = vmatprep.subr.mxu0 %v40
    %125 = vmatpush1.msra.mxu0 %v39
    %126 = vmatprep.subr.mxu0 %v42
    %127 = vmatpush1.msra.mxu0 %v41
    %128 = vmatprep.subr.mxu0 %v44
    %129 = vmatpush1.msra.mxu0 %v43
    %130 = vmatprep.subr.mxu0 %v46
    %131 = vmatpush1.msra.mxu0 %v45
    %132 = vmatprep.subr.mxu0 %v48
    %133 = vmatpush1.msra.mxu0 %v47
    %134 = vmatprep.subr.mxu0 %v50
    %135 = vmatpush1.msra.mxu0 %v49
    %136 = vmatprep.subr.mxu0 %v52
    %137 = vmatpush1.msra.mxu0 %v51
    %138 = vmatprep.subr.mxu0 %v54
    %139 = vmatpush1.msra.mxu0 %v53
    %140 = vmatprep.subr.mxu0 0.0
    %141 = vmatpush1.msra.mxu0 0.0
    %142 = vmatprep.subr.mxu0 0.0
    %143 = vmatpush1.msra.mxu0 0.0
    %144 = vmatprep.subr.mxu0 0.0
    %145 = vmatpush1.msra.mxu0 0.0
    %146 = vmatprep.subr.mxu0 0.0
    %147 = vmatpush1.msra.mxu0 0.0
    %148 = vmatprep.subr.mxu0 0.0
    %149 = vmatpush1.msra.mxu0 0.0
    %150 = vmatprep.subr.mxu0 0.0
    %151 = vmatpush1.msra.mxu0 0.0
    %152 = vmatprep.subr.mxu0 0.0
    %153 = vmatpush1.msra.mxu0 0.0
    %154 = vmatprep.subr.mxu0 0.0
    %155 = vmatpush1.msra.mxu0 0.0
    %156 = vmatprep.subr.mxu0 0.0
    %157 = vmatpush1.msra.mxu0 0.0
    %158 = vmatprep.subr.mxu0 0.0
    %159 = vmatpush1.msra.mxu0 0.0
    %160 = vmatprep.subr.mxu0 0.0
    %161 = vmatpush1.msra.mxu0 0.0
    %162 = vmatprep.subr.mxu0 0.0
    %163 = vmatpush1.msra.mxu0 0.0
    %164 = vmatprep.subr.mxu0 0.0
    %165 = vmatpush1.msra.mxu0 0.0
    %166 = vmatprep.subr.mxu0 0.0
    %167 = vmatpush1.msra.mxu0 0.0
    %168 = vmatprep.subr.mxu0 0.0
    %169 = vmatpush1.msra.mxu0 0.0
    %170 = vmatprep.subr.mxu0 0.0
    %171 = vmatpush1.msra.mxu0 0.0
    %172 = vmatprep.subr.mxu0 0.0
    %173 = vmatpush1.msra.mxu0 0.0
    %174 = vmatprep.subr.mxu0 0.0
    %175 = vmatpush1.msra.mxu0 0.0
    %176 = vmatprep.subr.mxu0 0.0
    %177 = vmatpush1.msra.mxu0 0.0
    %178 = vmatprep.subr.mxu0 0.0
    %179 = vmatpush1.msra.mxu0 0.0
    %180 = vmatprep.subr.mxu0 0.0
    %181 = vmatpush1.msra.mxu0 0.0
    %182 = vmatprep.subr.mxu0 0.0
    %183 = vmatpush1.msra.mxu0 0.0
    %184 = vmatprep.subr.mxu0 0.0
    %185 = vmatpush1.msra.mxu0 0.0
    %186 = vmatprep.subr.mxu0 0.0
    %187 = vmatpush1.msra.mxu0 0.0
    %188 = vmatprep.mubr.f32.mxu0 0.0
    %189 = vmatmul.mubr.f32.gmra.mrb[0].mxu0 %v122
    %v190 = vpop.f32.mrb[0].mxu0
    %v191 = vadd.f32 0.0, %v190
    %v192 = vpop.f32.mrb[0].mxu0
    %v193 = vadd.f32 0.0, %v192
    %194 = vdwg.mxu0
    %v195 = vlaneseq
    %v196 = vshrl.u32 %v195, 7
    %v197 = vlaneseq
    %v198 = vshrl.u32 %v197, 7
    %v199 = vsub.s32 0, %v198
    %v200 = vrot.slane %v117, %v199
    %v201 = vmul.f32 %v191, %v200
    %v202 = vrot.slane %v191, 7
    %vm203 = vcmp.ge.s32.totalorder %v196, 1
    %v204 = vsel %vm203, %v202, 0.0
    %v205 = vlaneseq
    %v206 = vshrl.u32 %v205, 7
    %v207 = vsub.s32 1, %v206
    %v208 = vrot.slane %v117, %v207
    %v209 = vmul.f32 %v204, %v208
    %v210 = vadd.f32 %v201, %v209
    %v211 = vrot.slane %v191, 6
    %vm212 = vcmp.ge.s32.totalorder %v196, 2
    %v213 = vsel %vm212, %v211, 0.0
    %v214 = vlaneseq
    %v215 = vshrl.u32 %v214, 7
    %v216 = vsub.s32 2, %v215
    %v217 = vrot.slane %v117, %v216
    %v218 = vmul.f32 %v213, %v217
    %v219 = vadd.f32 %v210, %v218
    %v220 = vrot.slane %v191, 5
    %vm221 = vcmp.ge.s32.totalorder %v196, 3
    %v222 = vsel %vm221, %v220, 0.0
    %v223 = vlaneseq
    %v224 = vshrl.u32 %v223, 7
    %v225 = vsub.s32 3, %v224
    %v226 = vrot.slane %v117, %v225
    %v227 = vmul.f32 %v222, %v226
    %v228 = vadd.f32 %v219, %v227
    %v229 = vlaneseq
    %v230 = vshrl.u32 %v229, 7
    %v231 = vsub.s32 4, %v230
    %v232 = vrot.slane %v117, %v231
    %v233 = vadd.f32 %v228, %v232
    %v234 = vsub.f32 0.0, %v233
    %v235 = vmul.f32 %v234, 1.442695
    %v236 = vpow.pop %v235
    %v237 = vadd.f32 %v236, 1.0
    %v238 = vrcp.pop %v237
    %v239 = vmul.f32 1.0, %v238
    %v240 = vmul.f32 %v233, %v239
    %v241 = vlaneseq
    %v242 = vshrl.u32 %v241, 7
    %v243 = vsub.s32 5, %v242
    %v244 = vrot.slane %v117, %v243
    %v245 = vlaneseq
    %v246 = vshrl.u32 %v245, 7
    %v247 = vsub.s32 5, %v246
    %v248 = vrot.slane %v118, %v247
    %249 = vmatprep.subr.mxu0 %v56
    %250 = vmatpush1.msra.mxu0 %v55
    %251 = vmatprep.subr.mxu0 %v58
    %252 = vmatpush1.msra.mxu0 %v57
    %253 = vmatprep.subr.mxu0 %v60
    %254 = vmatpush1.msra.mxu0 %v59
    %255 = vmatprep.subr.mxu0 %v62
    %256 = vmatpush1.msra.mxu0 %v61
    %257 = vmatprep.subr.mxu0 %v64
    %258 = vmatpush1.msra.mxu0 %v63
    %259 = vmatprep.subr.mxu0 %v66
    %260 = vmatpush1.msra.mxu0 %v65
    %261 = vmatprep.subr.mxu0 %v68
    %262 = vmatpush1.msra.mxu0 %v67
    %263 = vmatprep.subr.mxu0 %v70
    %264 = vmatpush1.msra.mxu0 %v69
    %265 = vmatprep.subr.mxu0 %v72
    %266 = vmatpush1.msra.mxu0 %v71
    %267 = vmatprep.subr.mxu0 %v74
    %268 = vmatpush1.msra.mxu0 %v73
    %269 = vmatprep.subr.mxu0 %v76
    %270 = vmatpush1.msra.mxu0 %v75
    %271 = vmatprep.subr.mxu0 %v78
    %272 = vmatpush1.msra.mxu0 %v77
    %273 = vmatprep.subr.mxu0 %v80
    %274 = vmatpush1.msra.mxu0 %v79
    %275 = vmatprep.subr.mxu0 %v82
    %276 = vmatpush1.msra.mxu0 %v81
    %277 = vmatprep.subr.mxu0 %v84
    %278 = vmatpush1.msra.mxu0 %v83
    %279 = vmatprep.subr.mxu0 %v86
    %280 = vmatpush1.msra.mxu0 %v85
    %281 = vmatprep.subr.mxu0 0.0
    %282 = vmatpush1.msra.mxu0 0.0
    %283 = vmatprep.subr.mxu0 0.0
    %284 = vmatpush1.msra.mxu0 0.0
    %285 = vmatprep.subr.mxu0 0.0
    %286 = vmatpush1.msra.mxu0 0.0
    %287 = vmatprep.subr.mxu0 0.0
    %288 = vmatpush1.msra.mxu0 0.0
    %289 = vmatprep.subr.mxu0 0.0
    %290 = vmatpush1.msra.mxu0 0.0
    %291 = vmatprep.subr.mxu0 0.0
    %292 = vmatpush1.msra.mxu0 0.0
    %293 = vmatprep.subr.mxu0 0.0
    %294 = vmatpush1.msra.mxu0 0.0
    %295 = vmatprep.subr.mxu0 0.0
    %296 = vmatpush1.msra.mxu0 0.0
    %297 = vmatprep.subr.mxu0 0.0
    %298 = vmatpush1.msra.mxu0 0.0
    %299 = vmatprep.subr.mxu0 0.0
    %300 = vmatpush1.msra.mxu0 0.0
    %301 = vmatprep.subr.mxu0 0.0
    %302 = vmatpush1.msra.mxu0 0.0
    %303 = vmatprep.subr.mxu0 0.0
    %304 = vmatpush1.msra.mxu0 0.0
    %305 = vmatprep.subr.mxu0 0.0
    %306 = vmatpush1.msra.mxu0 0.0
    %307 = vmatprep.subr.mxu0 0.0
    %308 = vmatpush1.msra.mxu0 0.0
    %309 = vmatprep.subr.mxu0 0.0
    %310 = vmatpush1.msra.mxu0 0.0
    %311 = vmatprep.subr.mxu0 0.0
    %312 = vmatpush1.msra.mxu0 0.0
    %313 = vmatprep.mubr.f32.mxu0 0.0
    %314 = vmatmul.mubr.f32.gmra.mrb[0].mxu0 %v240
    %v315 = vpop.f32.mrb[0].mxu0
    %v316 = vadd.f32 %v244, %v315
    %v317 = vpop.f32.mrb[0].mxu0
    %v318 = vadd.f32 %v248, %v317
    %319 = vdwg.mxu0
    %vm320 = vcmp.gt.f32.partialorder %v316, 20.0
    %v321 = vsel %vm320, 0.0, %v316
    %v322 = vmul.f32 %v321, 1.442695
    %v323 = vpow.pop %v322
    %v324 = vadd.f32 %v323, 1.0
    %v325 = vlog2.pop %v324
    %v326 = vmul.f32 %v325, 0.6931472
    %v327 = vsel %vm320, %v316, %v326
    %v328 = vmul.f32 %v327, %v240
    %v329 = vlaneseq
    %v330 = vshrl.u32 %v329, 7
    %v331 = vsub.s32 0, %v330
    %v332 = vrot.slane %v318, %v331
    %334 = vbcast.lane.b32.xlu0 %v332, 256
    %v335 = vpop.permute.xlu0 %334
    %s337 = sor.u32 256, 8
    %338 = vbcast.lane.b32.xlu0 %v332, %s337
    %v339 = vpop.permute.xlu0 %338
    %v340 = vlaneseq
    %v341 = vshrl.u32 %v340, 7
    %v342 = vsub.s32 1, %v341
    %v343 = vrot.slane %v318, %v342
    %345 = vbcast.lane.b32.xlu0 %v343, 256
    %v346 = vpop.permute.xlu0 %345
    %s348 = sor.u32 256, 8
    %349 = vbcast.lane.b32.xlu0 %v343, %s348
    %v350 = vpop.permute.xlu0 %349
    %v351 = vlaneseq
    %v352 = vshrl.u32 %v351, 7
    %v353 = vsub.s32 2, %v352
    %v354 = vrot.slane %v318, %v353
    %356 = vbcast.lane.b32.xlu0 %v354, 256
    %v357 = vpop.permute.xlu0 %356
    %s359 = sor.u32 256, 8
    %360 = vbcast.lane.b32.xlu0 %v354, %s359
    %v361 = vpop.permute.xlu0 %360
    %v362 = vlaneseq
    %v363 = vshrl.u32 %v362, 7
    %v364 = vsub.s32 3, %v363
    %v365 = vrot.slane %v318, %v364
    %367 = vbcast.lane.b32.xlu0 %v365, 256
    %v368 = vpop.permute.xlu0 %367
    %s370 = sor.u32 256, 8
    %371 = vbcast.lane.b32.xlu0 %v365, %s370
    %v372 = vpop.permute.xlu0 %371
    %v373 = vlaneseq
    %v374 = vshrl.u32 %v373, 7
    %v375 = vsub.s32 4, %v374
    %v376 = vrot.slane %v318, %v375
    %378 = vbcast.lane.b32.xlu0 %v376, 256
    %v379 = vpop.permute.xlu0 %378
    %s381 = sor.u32 256, 8
    %382 = vbcast.lane.b32.xlu0 %v376, %s381
    %v383 = vpop.permute.xlu0 %382
    %v384 = vlaneseq
    %v385 = vshrl.u32 %v384, 7
    %v386 = vsub.s32 5, %v385
    %v387 = vrot.slane %v318, %v386
    %389 = vbcast.lane.b32.xlu0 %v387, 256
    %v390 = vpop.permute.xlu0 %389
    %s392 = sor.u32 256, 8
    %393 = vbcast.lane.b32.xlu0 %v387, %s392
    %v394 = vpop.permute.xlu0 %393
    %v395 = vlaneseq
    %v396 = vshrl.u32 %v395, 7
    %v397 = vsub.s32 6, %v396
    %v398 = vrot.slane %v318, %v397
    %400 = vbcast.lane.b32.xlu0 %v398, 256
    %v401 = vpop.permute.xlu0 %400
    %s403 = sor.u32 256, 8
    %404 = vbcast.lane.b32.xlu0 %v398, %s403
    %v405 = vpop.permute.xlu0 %404
    %v406 = vlaneseq
    %v407 = vshrl.u32 %v406, 7
    %v408 = vsub.s32 7, %v407
    %v409 = vrot.slane %v318, %v408
    %411 = vbcast.lane.b32.xlu0 %v409, 256
    %v412 = vpop.permute.xlu0 %411
    %s414 = sor.u32 256, 8
    %415 = vbcast.lane.b32.xlu0 %v409, %s414
    %v416 = vpop.permute.xlu0 %415
    %s418 = sor.u32 256, 16
    %419 = vbcast.lane.b32.xlu0 %v332, %s418
    %v420 = vpop.permute.xlu0 %419
    %s422 = sor.u32 256, 24
    %423 = vbcast.lane.b32.xlu0 %v332, %s422
    %v424 = vpop.permute.xlu0 %423
    %s426 = sor.u32 256, 16
    %427 = vbcast.lane.b32.xlu0 %v343, %s426
    %v428 = vpop.permute.xlu0 %427
    %s430 = sor.u32 256, 24
    %431 = vbcast.lane.b32.xlu0 %v343, %s430
    %v432 = vpop.permute.xlu0 %431
    %s434 = sor.u32 256, 16
    %435 = vbcast.lane.b32.xlu0 %v354, %s434
    %v436 = vpop.permute.xlu0 %435
    %s438 = sor.u32 256, 24
    %439 = vbcast.lane.b32.xlu0 %v354, %s438
    %v440 = vpop.permute.xlu0 %439
    %s442 = sor.u32 256, 16
    %443 = vbcast.lane.b32.xlu0 %v365, %s442
    %v444 = vpop.permute.xlu0 %443
    %s446 = sor.u32 256, 24
    %447 = vbcast.lane.b32.xlu0 %v365, %s446
    %v448 = vpop.permute.xlu0 %447
    %s450 = sor.u32 256, 16
    %451 = vbcast.lane.b32.xlu0 %v376, %s450
    %v452 = vpop.permute.xlu0 %451
    %s454 = sor.u32 256, 24
    %455 = vbcast.lane.b32.xlu0 %v376, %s454
    %v456 = vpop.permute.xlu0 %455
    %s458 = sor.u32 256, 16
    %459 = vbcast.lane.b32.xlu0 %v387, %s458
    %v460 = vpop.permute.xlu0 %459
    %s462 = sor.u32 256, 24
    %463 = vbcast.lane.b32.xlu0 %v387, %s462
    %v464 = vpop.permute.xlu0 %463
    %s466 = sor.u32 256, 16
    %467 = vbcast.lane.b32.xlu0 %v398, %s466
    %v468 = vpop.permute.xlu0 %467
    %s470 = sor.u32 256, 24
    %471 = vbcast.lane.b32.xlu0 %v398, %s470
    %v472 = vpop.permute.xlu0 %471
    %s474 = sor.u32 256, 16
    %475 = vbcast.lane.b32.xlu0 %v409, %s474
    %v476 = vpop.permute.xlu0 %475
    %s478 = sor.u32 256, 24
    %479 = vbcast.lane.b32.xlu0 %v409, %s478
    %v480 = vpop.permute.xlu0 %479
    %v481 = vsel %vm120, %v335, %v420
    %v482 = vsel %vm120, %v339, %v424
    %v483 = vsel %vm120, %v346, %v428
    %v484 = vsel %vm120, %v350, %v432
    %v485 = vsel %vm120, %v357, %v436
    %v486 = vsel %vm120, %v361, %v440
    %v487 = vsel %vm120, %v368, %v444
    %v488 = vsel %vm120, %v372, %v448
    %v489 = vsel %vm120, %v379, %v452
    %v490 = vsel %vm120, %v383, %v456
    %v491 = vsel %vm120, %v390, %v460
    %v492 = vsel %vm120, %v394, %v464
    %v493 = vsel %vm120, %v401, %v468
    %v494 = vsel %vm120, %v405, %v472
    %v495 = vsel %vm120, %v412, %v476
    %v496 = vsel %vm120, %v416, %v480
    %s498 = sor.u32 256, 32
    %499 = vbcast.lane.b32.xlu0 %v332, %s498
    %v500 = vpop.permute.xlu0 %499
    %s502 = sor.u32 256, 40
    %503 = vbcast.lane.b32.xlu0 %v332, %s502
    %v504 = vpop.permute.xlu0 %503
    %s506 = sor.u32 256, 32
    %507 = vbcast.lane.b32.xlu0 %v343, %s506
    %v508 = vpop.permute.xlu0 %507
    %s510 = sor.u32 256, 40
    %511 = vbcast.lane.b32.xlu0 %v343, %s510
    %v512 = vpop.permute.xlu0 %511
    %s514 = sor.u32 256, 32
    %515 = vbcast.lane.b32.xlu0 %v354, %s514
    %v516 = vpop.permute.xlu0 %515
    %s518 = sor.u32 256, 40
    %519 = vbcast.lane.b32.xlu0 %v354, %s518
    %v520 = vpop.permute.xlu0 %519
    %s522 = sor.u32 256, 32
    %523 = vbcast.lane.b32.xlu0 %v365, %s522
    %v524 = vpop.permute.xlu0 %523
    %s526 = sor.u32 256, 40
    %527 = vbcast.lane.b32.xlu0 %v365, %s526
    %v528 = vpop.permute.xlu0 %527
    %s530 = sor.u32 256, 32
    %531 = vbcast.lane.b32.xlu0 %v376, %s530
    %v532 = vpop.permute.xlu0 %531
    %s534 = sor.u32 256, 40
    %535 = vbcast.lane.b32.xlu0 %v376, %s534
    %v536 = vpop.permute.xlu0 %535
    %s538 = sor.u32 256, 32
    %539 = vbcast.lane.b32.xlu0 %v387, %s538
    %v540 = vpop.permute.xlu0 %539
    %s542 = sor.u32 256, 40
    %543 = vbcast.lane.b32.xlu0 %v387, %s542
    %v544 = vpop.permute.xlu0 %543
    %s546 = sor.u32 256, 32
    %547 = vbcast.lane.b32.xlu0 %v398, %s546
    %v548 = vpop.permute.xlu0 %547
    %s550 = sor.u32 256, 40
    %551 = vbcast.lane.b32.xlu0 %v398, %s550
    %v552 = vpop.permute.xlu0 %551
    %s554 = sor.u32 256, 32
    %555 = vbcast.lane.b32.xlu0 %v409, %s554
    %v556 = vpop.permute.xlu0 %555
    %s558 = sor.u32 256, 40
    %559 = vbcast.lane.b32.xlu0 %v409, %s558
    %v560 = vpop.permute.xlu0 %559
    %s562 = sor.u32 256, 48
    %563 = vbcast.lane.b32.xlu0 %v332, %s562
    %v564 = vpop.permute.xlu0 %563
    %s566 = sor.u32 256, 56
    %567 = vbcast.lane.b32.xlu0 %v332, %s566
    %v568 = vpop.permute.xlu0 %567
    %s570 = sor.u32 256, 48
    %571 = vbcast.lane.b32.xlu0 %v343, %s570
    %v572 = vpop.permute.xlu0 %571
    %s574 = sor.u32 256, 56
    %575 = vbcast.lane.b32.xlu0 %v343, %s574
    %v576 = vpop.permute.xlu0 %575
    %s578 = sor.u32 256, 48
    %579 = vbcast.lane.b32.xlu0 %v354, %s578
    %v580 = vpop.permute.xlu0 %579
    %s582 = sor.u32 256, 56
    %583 = vbcast.lane.b32.xlu0 %v354, %s582
    %v584 = vpop.permute.xlu0 %583
    %s586 = sor.u32 256, 48
    %587 = vbcast.lane.b32.xlu0 %v365, %s586
    %v588 = vpop.permute.xlu0 %587
    %s590 = sor.u32 256, 56
    %591 = vbcast.lane.b32.xlu0 %v365, %s590
    %v592 = vpop.permute.xlu0 %591
    %s594 = sor.u32 256, 48
    %595 = vbcast.lane.b32.xlu0 %v376, %s594
    %v596 = vpop.permute.xlu0 %595
    %s598 = sor.u32 256, 56
    %599 = vbcast.lane.b32.xlu0 %v376, %s598
    %v600 = vpop.permute.xlu0 %599
    %s602 = sor.u32 256, 48
    %603 = vbcast.lane.b32.xlu0 %v387, %s602
    %v604 = vpop.permute.xlu0 %603
    %s606 = sor.u32 256, 56
    %607 = vbcast.lane.b32.xlu0 %v387, %s606
    %v608 = vpop.permute.xlu0 %607
    %s610 = sor.u32 256, 48
    %611 = vbcast.lane.b32.xlu0 %v398, %s610
    %v612 = vpop.permute.xlu0 %611
    %s614 = sor.u32 256, 56
    %615 = vbcast.lane.b32.xlu0 %v398, %s614
    %v616 = vpop.permute.xlu0 %615
    %s618 = sor.u32 256, 48
    %619 = vbcast.lane.b32.xlu0 %v409, %s618
    %v620 = vpop.permute.xlu0 %619
    %s622 = sor.u32 256, 56
    %623 = vbcast.lane.b32.xlu0 %v409, %s622
    %v624 = vpop.permute.xlu0 %623
    %v625 = vsel %vm120, %v500, %v564
    %v626 = vsel %vm120, %v504, %v568
    %v627 = vsel %vm120, %v508, %v572
    %v628 = vsel %vm120, %v512, %v576
    %v629 = vsel %vm120, %v516, %v580
    %v630 = vsel %vm120, %v520, %v584
    %v631 = vsel %vm120, %v524, %v588
    %v632 = vsel %vm120, %v528, %v592
    %v633 = vsel %vm120, %v532, %v596
    %v634 = vsel %vm120, %v536, %v600
    %v635 = vsel %vm120, %v540, %v604
    %v636 = vsel %vm120, %v544, %v608
    %v637 = vsel %vm120, %v548, %v612
    %v638 = vsel %vm120, %v552, %v616
    %v639 = vsel %vm120, %v556, %v620
    %v640 = vsel %vm120, %v560, %v624
    %v642 = vcombine.high %v328, %v328
    %v644 = vunpack.c.l.s4 1966171168
    %v645 = vunpack.c.0.s8 %v644
    %v646 = vlaneseq
    %v647 = vshrl.u32 %v646, 7
    %v648 = vsub.s32 %v645, %v647
    %v649 = vrot.slane %v328, %v648
    %v651 = vunpack.c.l.s4 1966171168
    %v652 = vunpack.c.0.s8 %v651
    %v653 = vlaneseq
    %v654 = vshrl.u32 %v653, 7
    %v655 = vsub.s32 %v652, %v654
    %v656 = vrot.slane %v642, %v655
    %v657 = vcombine.high %v649, %v649
    %v658 = vcombine.high %v656, %v656
    %v660 = vunpack.c.l.s4 1966171168
    %v661 = vunpack.c.0.s8 %v660
    %v662 = vlaneseq
    %v663 = vshrl.u32 %v662, 7
    %v664 = vsub.s32 %v661, %v663
    %v665 = vrot.slane %v649, %v664
    %v667 = vunpack.c.l.s4 1966171168
    %v668 = vunpack.c.0.s8 %v667
    %v669 = vlaneseq
    %v670 = vshrl.u32 %v669, 7
    %v671 = vsub.s32 %v668, %v670
    %v672 = vrot.slane %v656, %v671
    %v674 = vunpack.c.l.s4 1966171168
    %v675 = vunpack.c.0.s8 %v674
    %v676 = vlaneseq
    %v677 = vshrl.u32 %v676, 7
    %v678 = vsub.s32 %v675, %v677
    %v679 = vrot.slane %v657, %v678
    %v681 = vunpack.c.l.s4 1966171168
    %v682 = vunpack.c.0.s8 %v681
    %v683 = vlaneseq
    %v684 = vshrl.u32 %v683, 7
    %v685 = vsub.s32 %v682, %v684
    %v686 = vrot.slane %v658, %v685
    %v687 = vcombine.high %v665, %v665
    %v688 = vcombine.high %v672, %v672
    %v689 = vcombine.high %v679, %v679
    %v690 = vcombine.high %v686, %v686
    %v691 = vlaneseq
    %v692 = vshrl.u32 %v691, 7
    %v693 = vsub.s32 0, %v692
    %v694 = vrot.slane %v665, %v693
    %v695 = vlaneseq
    %v696 = vshrl.u32 %v695, 7
    %v697 = vsub.s32 0, %v696
    %v698 = vrot.slane %v679, %v697
    %v699 = vlaneseq
    %v700 = vshrl.u32 %v699, 7
    %v701 = vsub.s32 0, %v700
    %v702 = vrot.slane %v687, %v701
    %v703 = vlaneseq
    %v704 = vshrl.u32 %v703, 7
    %v705 = vsub.s32 0, %v704
    %v706 = vrot.slane %v689, %v705
    %v707 = vlaneseq
    %v708 = vshrl.u32 %v707, 7
    %v709 = vsub.s32 0, %v708
    %v710 = vrot.slane %v672, %v709
    %v711 = vlaneseq
    %v712 = vshrl.u32 %v711, 7
    %v713 = vsub.s32 0, %v712
    %v714 = vrot.slane %v686, %v713
    %v715 = vlaneseq
    %v716 = vshrl.u32 %v715, 7
    %v717 = vsub.s32 0, %v716
    %v718 = vrot.slane %v688, %v717
    %v719 = vlaneseq
    %v720 = vshrl.u32 %v719, 7
    %v721 = vsub.s32 0, %v720
    %v722 = vrot.slane %v690, %v721
    %v731 = vmul.f32 %v481, %v694
    %v732 = vmul.f32 %v482, %v694
    %v733 = vmul.f32 %v483, %v698
    %v734 = vmul.f32 %v484, %v698
    %v735 = vmul.f32 %v485, %v702
    %v736 = vmul.f32 %v486, %v702
    %v737 = vmul.f32 %v487, %v706
    %v738 = vmul.f32 %v488, %v706
    %v739 = vmul.f32 %v489, %v710
    %v740 = vmul.f32 %v490, %v710
    %v741 = vmul.f32 %v491, %v714
    %v742 = vmul.f32 %v492, %v714
    %v743 = vmul.f32 %v493, %v718
    %v744 = vmul.f32 %v494, %v718
    %v745 = vmul.f32 %v495, %v722
    %v746 = vmul.f32 %v496, %v722
    %v747 = vlaneseq
    %v748 = vshrl.u32 %v747, 7
    %v749 = vsub.s32 0, %v748
    %v750 = vrot.slane %v327, %v749
    %v751 = vmul.f32 %v750, %v103
    %v752 = vmul.f32 %v750, %v104
    %v753 = vmul.f32 %v751, 1.442695
    %v754 = vpow.pop %v753
    %v755 = vmul.f32 %v752, 1.442695
    %v756 = vpow.pop %v755
    %v757 = vmul.f32 %v754, 0.0
    %v758 = vmul.f32 %v756, 0.0
    %v759 = vadd.f32 %v757, %v731
    %v760 = vadd.f32 %v758, %v732
    %v761 = vmul.f32 %v625, %v759
    %v762 = vmul.f32 %v626, %v760
    %v763 = vadd.f32 %v761, %v762
    %v764 = vrot.slane %v763, 4
    %v765 = vadd.f32 %v763, %v764
    %v766 = vrot.slane %v765, 2
    %v767 = vadd.f32 %v765, %v766
    %v768 = vrot.slane %v767, 1
    %v769 = vadd.f32 %v767, %v768
    %v770 = vlaneseq
    %v771 = vshrl.u32 %v770, 7
    %v772 = vsub.s32 1, %v771
    %v773 = vrot.slane %v327, %v772
    %v774 = vmul.f32 %v773, %v103
    %v775 = vmul.f32 %v773, %v104
    %v776 = vmul.f32 %v774, 1.442695
    %v777 = vpow.pop %v776
    %v778 = vmul.f32 %v775, 1.442695
    %v779 = vpow.pop %v778
    %v780 = vmul.f32 %v777, %v759
    %v781 = vmul.f32 %v779, %v760
    %v782 = vadd.f32 %v780, %v733
    %v783 = vadd.f32 %v781, %v734
    %v784 = vmul.f32 %v627, %v782
    %v785 = vmul.f32 %v628, %v783
    %v786 = vadd.f32 %v784, %v785
    %v787 = vrot.slane %v786, 4
    %v788 = vadd.f32 %v786, %v787
    %v789 = vrot.slane %v788, 2
    %v790 = vadd.f32 %v788, %v789
    %v791 = vrot.slane %v790, 1
    %v792 = vadd.f32 %v790, %v791
    %v793 = vlaneseq
    %v794 = vshrl.u32 %v793, 7
    %v795 = vsub.s32 2, %v794
    %v796 = vrot.slane %v327, %v795
    %v797 = vmul.f32 %v796, %v103
    %v798 = vmul.f32 %v796, %v104
    %v799 = vmul.f32 %v797, 1.442695
    %v800 = vpow.pop %v799
    %v801 = vmul.f32 %v798, 1.442695
    %v802 = vpow.pop %v801
    %v803 = vmul.f32 %v800, %v782
    %v804 = vmul.f32 %v802, %v783
    %v805 = vadd.f32 %v803, %v735
    %v806 = vadd.f32 %v804, %v736
    %v807 = vmul.f32 %v629, %v805
    %v808 = vmul.f32 %v630, %v806
    %v809 = vadd.f32 %v807, %v808
    %v810 = vrot.slane %v809, 4
    %v811 = vadd.f32 %v809, %v810
    %v812 = vrot.slane %v811, 2
    %v813 = vadd.f32 %v811, %v812
    %v814 = vrot.slane %v813, 1
    %v815 = vadd.f32 %v813, %v814
    %v816 = vlaneseq
    %v817 = vshrl.u32 %v816, 7
    %v818 = vsub.s32 3, %v817
    %v819 = vrot.slane %v327, %v818
    %v820 = vmul.f32 %v819, %v103
    %v821 = vmul.f32 %v819, %v104
    %v822 = vmul.f32 %v820, 1.442695
    %v823 = vpow.pop %v822
    %v824 = vmul.f32 %v821, 1.442695
    %v825 = vpow.pop %v824
    %v826 = vmul.f32 %v823, %v805
    %v827 = vmul.f32 %v825, %v806
    %v828 = vadd.f32 %v826, %v737
    %v829 = vadd.f32 %v827, %v738
    %v830 = vmul.f32 %v631, %v828
    %v831 = vmul.f32 %v632, %v829
    %v832 = vadd.f32 %v830, %v831
    %v833 = vrot.slane %v832, 4
    %v834 = vadd.f32 %v832, %v833
    %v835 = vrot.slane %v834, 2
    %v836 = vadd.f32 %v834, %v835
    %v837 = vrot.slane %v836, 1
    %v838 = vadd.f32 %v836, %v837
    %v839 = vlaneseq
    %v840 = vshrl.u32 %v839, 7
    %v841 = vsub.s32 4, %v840
    %v842 = vrot.slane %v327, %v841
    %v843 = vmul.f32 %v842, %v103
    %v844 = vmul.f32 %v842, %v104
    %v845 = vmul.f32 %v843, 1.442695
    %v846 = vpow.pop %v845
    %v847 = vmul.f32 %v844, 1.442695
    %v848 = vpow.pop %v847
    %v849 = vmul.f32 %v846, %v828
    %v850 = vmul.f32 %v848, %v829
    %v851 = vadd.f32 %v849, %v739
    %v852 = vadd.f32 %v850, %v740
    %v853 = vmul.f32 %v633, %v851
    %v854 = vmul.f32 %v634, %v852
    %v855 = vadd.f32 %v853, %v854
    %v856 = vrot.slane %v855, 4
    %v857 = vadd.f32 %v855, %v856
    %v858 = vrot.slane %v857, 2
    %v859 = vadd.f32 %v857, %v858
    %v860 = vrot.slane %v859, 1
    %v861 = vadd.f32 %v859, %v860
    %v862 = vlaneseq
    %v863 = vshrl.u32 %v862, 7
    %v864 = vsub.s32 5, %v863
    %v865 = vrot.slane %v327, %v864
    %v866 = vmul.f32 %v865, %v103
    %v867 = vmul.f32 %v865, %v104
    %v868 = vmul.f32 %v866, 1.442695
    %v869 = vpow.pop %v868
    %v870 = vmul.f32 %v867, 1.442695
    %v871 = vpow.pop %v870
    %v872 = vmul.f32 %v869, %v851
    %v873 = vmul.f32 %v871, %v852
    %v874 = vadd.f32 %v872, %v741
    %v875 = vadd.f32 %v873, %v742
    %v876 = vmul.f32 %v635, %v874
    %v877 = vmul.f32 %v636, %v875
    %v878 = vadd.f32 %v876, %v877
    %v879 = vrot.slane %v878, 4
    %v880 = vadd.f32 %v878, %v879
    %v881 = vrot.slane %v880, 2
    %v882 = vadd.f32 %v880, %v881
    %v883 = vrot.slane %v882, 1
    %v884 = vadd.f32 %v882, %v883
    %v885 = vlaneseq
    %v886 = vshrl.u32 %v885, 7
    %v887 = vsub.s32 6, %v886
    %v888 = vrot.slane %v327, %v887
    %v889 = vmul.f32 %v888, %v103
    %v890 = vmul.f32 %v888, %v104
    %v891 = vmul.f32 %v889, 1.442695
    %v892 = vpow.pop %v891
    %v893 = vmul.f32 %v890, 1.442695
    %v894 = vpow.pop %v893
    %v895 = vmul.f32 %v892, %v874
    %v896 = vmul.f32 %v894, %v875
    %v897 = vadd.f32 %v895, %v743
    %v898 = vadd.f32 %v896, %v744
    %v899 = vmul.f32 %v637, %v897
    %v900 = vmul.f32 %v638, %v898
    %v901 = vadd.f32 %v899, %v900
    %v902 = vrot.slane %v901, 4
    %v903 = vadd.f32 %v901, %v902
    %v904 = vrot.slane %v903, 2
    %v905 = vadd.f32 %v903, %v904
    %v906 = vrot.slane %v905, 1
    %v907 = vadd.f32 %v905, %v906
    %v908 = vlaneseq
    %v909 = vshrl.u32 %v908, 7
    %v910 = vsub.s32 7, %v909
    %v911 = vrot.slane %v327, %v910
    %v912 = vmul.f32 %v911, %v103
    %v913 = vmul.f32 %v911, %v104
    %v914 = vmul.f32 %v912, 1.442695
    %v915 = vpow.pop %v914
    %v916 = vmul.f32 %v913, 1.442695
    %v917 = vpow.pop %v916
    %v918 = vmul.f32 %v915, %v897
    %v919 = vmul.f32 %v917, %v898
    %v920 = vadd.f32 %v918, %v745
    %v921 = vadd.f32 %v919, %v746
    %v922 = vmul.f32 %v639, %v920
    %v923 = vmul.f32 %v640, %v921
    %v924 = vadd.f32 %v922, %v923
    %v925 = vrot.slane %v924, 4
    %v926 = vadd.f32 %v924, %v925
    %v927 = vrot.slane %v926, 2
    %v928 = vadd.f32 %v926, %v927
    %v929 = vrot.slane %v928, 1
    %v930 = vadd.f32 %v928, %v929
    %vm931 = vcmask 1040384
    %v932 = vsel %vm931, %v769, %v792
    %vm933 = vcmask 1041408
    %v934 = vsel %vm933, %v932, %v815
    %vm935 = vcmask 1042432
    %v936 = vsel %vm935, %v934, %v838
    %vm937 = vcmask 1043456
    %v938 = vsel %vm937, %v936, %v861
    %vm939 = vcmask 1044480
    %v940 = vsel %vm939, %v938, %v884
    %vm941 = vcmask 1045504
    %v942 = vsel %vm941, %v940, %v907
    %vm943 = vcmask 1046528
    %v944 = vsel %vm943, %v942, %v930
    %v945 = vlaneseq
    %v946 = vshrl.u32 %v945, 7
    %v947 = vsub.s32 6, %v946
    %v948 = vrot.slane %v117, %v947
    %v949 = vmul.f32 %v240, %v948
    %v950 = vadd.f32 %v944, %v949
    %v951 = vsub.f32 0.0, %v193
    %v952 = vmul.f32 %v951, 1.442695
    %v953 = vpow.pop %v952
    %v954 = vadd.f32 %v953, 1.0
    %v955 = vrcp.pop %v954
    %v956 = vmul.f32 1.0, %v955
    %v957 = vmul.f32 %v193, %v956
    %v958 = vmul.f32 %v950, %v957
    %959 = vmatprep.subr.mxu0 0.0
    %960 = vmatpush1.msra.mxu0 %v87
    %961 = vmatprep.subr.mxu0 0.0
    %962 = vmatpush1.msra.mxu0 %v88
    %963 = vmatprep.subr.mxu0 0.0
    %964 = vmatpush1.msra.mxu0 %v89
    %965 = vmatprep.subr.mxu0 0.0
    %966 = vmatpush1.msra.mxu0 %v90
    %967 = vmatprep.subr.mxu0 0.0
    %968 = vmatpush1.msra.mxu0 %v91
    %969 = vmatprep.subr.mxu0 0.0
    %970 = vmatpush1.msra.mxu0 %v92
    %971 = vmatprep.subr.mxu0 0.0
    %972 = vmatpush1.msra.mxu0 %v93
    %973 = vmatprep.subr.mxu0 0.0
    %974 = vmatpush1.msra.mxu0 %v94
    %975 = vmatprep.subr.mxu0 0.0
    %976 = vmatpush1.msra.mxu0 %v95
    %977 = vmatprep.subr.mxu0 0.0
    %978 = vmatpush1.msra.mxu0 %v96
    %979 = vmatprep.subr.mxu0 0.0
    %980 = vmatpush1.msra.mxu0 %v97
    %981 = vmatprep.subr.mxu0 0.0
    %982 = vmatpush1.msra.mxu0 %v98
    %983 = vmatprep.subr.mxu0 0.0
    %984 = vmatpush1.msra.mxu0 %v99
    %985 = vmatprep.subr.mxu0 0.0
    %986 = vmatpush1.msra.mxu0 %v100
    %987 = vmatprep.subr.mxu0 0.0
    %988 = vmatpush1.msra.mxu0 %v101
    %989 = vmatprep.subr.mxu0 0.0
    %990 = vmatpush1.msra.mxu0 %v102
    %991 = vmatprep.subr.mxu0 0.0
    %992 = vmatpush1.msra.mxu0 0.0
    %993 = vmatprep.subr.mxu0 0.0
    %994 = vmatpush1.msra.mxu0 0.0
    %995 = vmatprep.subr.mxu0 0.0
    %996 = vmatpush1.msra.mxu0 0.0
    %997 = vmatprep.subr.mxu0 0.0
    %998 = vmatpush1.msra.mxu0 0.0
    %999 = vmatprep.subr.mxu0 0.0
    %1000 = vmatpush1.msra.mxu0 0.0
    %1001 = vmatprep.subr.mxu0 0.0
    %1002 = vmatpush1.msra.mxu0 0.0
    %1003 = vmatprep.subr.mxu0 0.0
    %1004 = vmatpush1.msra.mxu0 0.0
    %1005 = vmatprep.subr.mxu0 0.0
    %1006 = vmatpush1.msra.mxu0 0.0
    %1007 = vmatprep.subr.mxu0 0.0
    %1008 = vmatpush1.msra.mxu0 0.0
    %1009 = vmatprep.subr.mxu0 0.0
    %1010 = vmatpush1.msra.mxu0 0.0
    %1011 = vmatprep.subr.mxu0 0.0
    %1012 = vmatpush1.msra.mxu0 0.0
    %1013 = vmatprep.subr.mxu0 0.0
    %1014 = vmatpush1.msra.mxu0 0.0
    %1015 = vmatprep.subr.mxu0 0.0
    %1016 = vmatpush1.msra.mxu0 0.0
    %1017 = vmatprep.subr.mxu0 0.0
    %1018 = vmatpush1.msra.mxu0 0.0
    %1019 = vmatprep.subr.mxu0 0.0
    %1020 = vmatpush1.msra.mxu0 0.0
    %1021 = vmatprep.subr.mxu0 0.0
    %1022 = vmatpush1.msra.mxu0 0.0
    %1023 = vmatprep.mubr.f32.mxu0 0.0
    %1024 = vmatmul.mubr.f32.gmra.mrb[0].mxu0 %v958
    %v1025 = vpop.f32.mrb[0].mxu0
    %v1026 = vadd.f32 0.0, %v1025
    %v1027 = vpop.f32.mrb[0].mxu0
    %1028 = vdwg.mxu0
    %v1029 = vsel %vm120, %v1026, 0.0
    %v1030 = vrot.slane %v1029, 4
    %v1031 = vadd.f32 %v1029, %v1030
    %v1032 = vrot.slane %v1031, 2
    %v1033 = vadd.f32 %v1031, %v1032
    %v1034 = vrot.slane %v1033, 1
    %v1035 = vadd.f32 %v1033, %v1034
    %v1036 = vrcp.pop 8.0
    %v1037 = vmul.f32 %v1035, %v1036
    %v1039 = vrot.slane %v117, 7
    %v1042 = vsel %vm120, %v1037, 0
    %1044 = vmatprep.subr.mxu0 0.0
    %1045 = vmatpush1.msra.mxu0 %v105
    %1046 = vmatprep.subr.mxu0 0.0
    %1047 = vmatpush1.msra.mxu0 %v106
    %1048 = vmatprep.subr.mxu0 0.0
    %1049 = vmatpush1.msra.mxu0 %v107
    %1050 = vmatprep.subr.mxu0 0.0
    %1051 = vmatpush1.msra.mxu0 %v108
    %1052 = vmatprep.subr.mxu0 0.0
    %1053 = vmatpush1.msra.mxu0 %v109
    %1054 = vmatprep.subr.mxu0 0.0
    %1055 = vmatpush1.msra.mxu0 %v110
    %1056 = vmatprep.subr.mxu0 0.0
    %1057 = vmatpush1.msra.mxu0 %v111
    %1058 = vmatprep.subr.mxu0 0.0
    %1059 = vmatpush1.msra.mxu0 %v112
    %1060 = vmatprep.subr.mxu0 0.0
    %1061 = vmatpush1.msra.mxu0 0.0
    %1062 = vmatprep.subr.mxu0 0.0
    %1063 = vmatpush1.msra.mxu0 0.0
    %1064 = vmatprep.subr.mxu0 0.0
    %1065 = vmatpush1.msra.mxu0 0.0
    %1066 = vmatprep.subr.mxu0 0.0
    %1067 = vmatpush1.msra.mxu0 0.0
    %1068 = vmatprep.subr.mxu0 0.0
    %1069 = vmatpush1.msra.mxu0 0.0
    %1070 = vmatprep.subr.mxu0 0.0
    %1071 = vmatpush1.msra.mxu0 0.0
    %1072 = vmatprep.subr.mxu0 0.0
    %1073 = vmatpush1.msra.mxu0 0.0
    %1074 = vmatprep.subr.mxu0 0.0
    %1075 = vmatpush1.msra.mxu0 0.0
    %1076 = vmatprep.subr.mxu0 0.0
    %1077 = vmatpush1.msra.mxu0 0.0
    %1078 = vmatprep.subr.mxu0 0.0
    %1079 = vmatpush1.msra.mxu0 0.0
    %1080 = vmatprep.subr.mxu0 0.0
    %1081 = vmatpush1.msra.mxu0 0.0
    %1082 = vmatprep.subr.mxu0 0.0
    %1083 = vmatpush1.msra.mxu0 0.0
    %1084 = vmatprep.subr.mxu0 0.0
    %1085 = vmatpush1.msra.mxu0 0.0
    %1086 = vmatprep.subr.mxu0 0.0
    %1087 = vmatpush1.msra.mxu0 0.0
    %1088 = vmatprep.subr.mxu0 0.0
    %1089 = vmatpush1.msra.mxu0 0.0
    %1090 = vmatprep.subr.mxu0 0.0
    %1091 = vmatpush1.msra.mxu0 0.0
    %1092 = vmatprep.subr.mxu0 0.0
    %1093 = vmatpush1.msra.mxu0 0.0
    %1094 = vmatprep.subr.mxu0 0.0
    %1095 = vmatpush1.msra.mxu0 0.0
    %1096 = vmatprep.subr.mxu0 0.0
    %1097 = vmatpush1.msra.mxu0 0.0
    %1098 = vmatprep.subr.mxu0 0.0
    %1099 = vmatpush1.msra.mxu0 0.0
    %1100 = vmatprep.subr.mxu0 0.0
    %1101 = vmatpush1.msra.mxu0 0.0
    %1102 = vmatprep.subr.mxu0 0.0
    %1103 = vmatpush1.msra.mxu0 0.0
    %1104 = vmatprep.subr.mxu0 0.0
    %1105 = vmatpush1.msra.mxu0 0.0
    %1106 = vmatprep.subr.mxu0 0.0
    %1107 = vmatpush1.msra.mxu0 0.0
    %1108 = vmatprep.mubr.f32.mxu0 0.0
    %1109 = vmatmul.mubr.f32.gmra.mrb[0].mxu0 %v1042
    %v1110 = vpop.f32.mrb[0].mxu0
    %v1111 = vadd.f32 %v1039, %v1110
    %v1112 = vpop.f32.mrb[0].mxu0
    %1113 = vdwg.mxu0
    %v1114 = vtanh.pop %v1111
    %vm1115 = vcmp.gt.f32.partialorder %v1114, 0.0
    %v1116 = vmin.f32 %v1114, 0.0
    %v1117 = vmul.f32 %v1116, 1.442695
    %v1118 = vpow.pop %v1117
    %v1119 = vsub.f32 %v1118, 1.0
    %v1120 = vsel %vm1115, %v1114, %v1119
    %vm1121 = vcmask 261120
    %v1123 = vsel %vm1121, %v1120, 0
    %1125 = vmatprep.subr.mxu0 0.0
    %1126 = vmatpush1.msra.mxu0 %v113
    %1127 = vmatprep.subr.mxu0 0.0
    %1128 = vmatpush1.msra.mxu0 %v114
    %1129 = vmatprep.subr.mxu0 0.0
    %1130 = vmatpush1.msra.mxu0 %v115
    %1131 = vmatprep.subr.mxu0 0.0
    %1132 = vmatpush1.msra.mxu0 %v116
    %1133 = vmatprep.subr.mxu0 0.0
    %1134 = vmatpush1.msra.mxu0 0.0
    %1135 = vmatprep.subr.mxu0 0.0
    %1136 = vmatpush1.msra.mxu0 0.0
    %1137 = vmatprep.subr.mxu0 0.0
    %1138 = vmatpush1.msra.mxu0 0.0
    %1139 = vmatprep.subr.mxu0 0.0
    %1140 = vmatpush1.msra.mxu0 0.0
    %1141 = vmatprep.subr.mxu0 0.0
    %1142 = vmatpush1.msra.mxu0 0.0
    %1143 = vmatprep.subr.mxu0 0.0
    %1144 = vmatpush1.msra.mxu0 0.0
    %1145 = vmatprep.subr.mxu0 0.0
    %1146 = vmatpush1.msra.mxu0 0.0
    %1147 = vmatprep.subr.mxu0 0.0
    %1148 = vmatpush1.msra.mxu0 0.0
    %1149 = vmatprep.subr.mxu0 0.0
    %1150 = vmatpush1.msra.mxu0 0.0
    %1151 = vmatprep.subr.mxu0 0.0
    %1152 = vmatpush1.msra.mxu0 0.0
    %1153 = vmatprep.subr.mxu0 0.0
    %1154 = vmatpush1.msra.mxu0 0.0
    %1155 = vmatprep.subr.mxu0 0.0
    %1156 = vmatpush1.msra.mxu0 0.0
    %1157 = vmatprep.subr.mxu0 0.0
    %1158 = vmatpush1.msra.mxu0 0.0
    %1159 = vmatprep.subr.mxu0 0.0
    %1160 = vmatpush1.msra.mxu0 0.0
    %1161 = vmatprep.subr.mxu0 0.0
    %1162 = vmatpush1.msra.mxu0 0.0
    %1163 = vmatprep.subr.mxu0 0.0
    %1164 = vmatpush1.msra.mxu0 0.0
    %1165 = vmatprep.subr.mxu0 0.0
    %1166 = vmatpush1.msra.mxu0 0.0
    %1167 = vmatprep.subr.mxu0 0.0
    %1168 = vmatpush1.msra.mxu0 0.0
    %1169 = vmatprep.subr.mxu0 0.0
    %1170 = vmatpush1.msra.mxu0 0.0
    %1171 = vmatprep.subr.mxu0 0.0
    %1172 = vmatpush1.msra.mxu0 0.0
    %1173 = vmatprep.subr.mxu0 0.0
    %1174 = vmatpush1.msra.mxu0 0.0
    %1175 = vmatprep.subr.mxu0 0.0
    %1176 = vmatpush1.msra.mxu0 0.0
    %1177 = vmatprep.subr.mxu0 0.0
    %1178 = vmatpush1.msra.mxu0 0.0
    %1179 = vmatprep.subr.mxu0 0.0
    %1180 = vmatpush1.msra.mxu0 0.0
    %1181 = vmatprep.subr.mxu0 0.0
    %1182 = vmatpush1.msra.mxu0 0.0
    %1183 = vmatprep.subr.mxu0 0.0
    %1184 = vmatpush1.msra.mxu0 0.0
    %1185 = vmatprep.subr.mxu0 0.0
    %1186 = vmatpush1.msra.mxu0 0.0
    %1187 = vmatprep.subr.mxu0 0.0
    %1188 = vmatpush1.msra.mxu0 0.0
    %1189 = vmatprep.mubr.f32.mxu0 0.0
    %1190 = vmatmul.mubr.f32.gmra.mrb[0].mxu0 %v1123
    %v1191 = vpop.f32.mrb[0].mxu0
    %v1192 = vadd.f32 %v119, %v1191
    %v1193 = vpop.f32.mrb[0].mxu0
    %1194 = vdwg.mxu0
    %v1195 = vlaneseq
    %v1196 = vand.u32 %v1195, 127
    %vm1197 = vcmp.lt.s32.totalorder %v1196, 32
    %vm1198 = vcmp.lt.s32.totalorder %v1196, 48
    %vm1199 = vcmp.gt.f32.partialorder %v1192, 0.0
    %v1200 = vmin.f32 %v1192, 0.0
    %v1201 = vmul.f32 %v1200, 1.442695
    %v1202 = vpow.pop %v1201
    %v1203 = vsub.f32 %v1202, 1.0
    %v1204 = vsel %vm1199, %v1192, %v1203
    %v1205 = vadd.f32 %v1204, 1.0
    %v1206 = vadd.f32 %v1205, 1e-14
    %v1207 = vsel %vm1198, %v1192, %v1206
    %v1208 = vsel %vm1197, %v1120, %v1207
    %v1209 = vlaneseq
    %v1210 = vshrl.u32 %v1209, 7
    %v1211 = vsub.s32 0, %v1210
    %v1212 = vrot.slane %v1208, %v1211
    %1213 = vst [vmem:[#allocation7] sm:$0xff] %v1212
    // Predicated region
    $region18: #{tpu_custom_call.1} parent=1 // pred_check
      _
    $region19: #{tpu_custom_call.1} parent=1 // pred_check_branch
      %1215 = sbr.rel (0) target = $region21
    $region20: #{tpu_custom_call.1} parent=1 // pred_region
      %s1217 = ssub.s32 128, 128
      %1218 = vsyncadd [#allocation4], %s1217
      %s1220 = sshll.u32 [#allocation7], 4
      %s1221 = int_to_ptr.vmem [resolvable:$true] %s1220
      %1223 = dma.vmem_to_hbm [thread:$0]  %s1221, 128, %s2, [#allocation4]
    $region21: #{tpu_custom_call.1} parent=1 // pred_fallthru
      _
    // Predicated region
    $region22: #{tpu_custom_call.1} parent=1 // pred_check
      _
    $region23: #{tpu_custom_call.1} parent=1 // pred_check_branch
      %1225 = sbr.rel (0) target = $region25
    $region24: #{tpu_custom_call.1} parent=1 // pred_region
      %1226 = dma.done [#allocation4], 128
    $region25: #{tpu_custom_call.1} parent=1 // pred_fallthru
      _
    %1227 = vsyncpa [#allocation3], 1
    %1228 = vsyncpa [#allocation6], 1
    %1229 = vsyncpa [#allocation4], 1

</llo_original>
